<compile_context>
chip_gen: v6e
topology: v6e:2x2x1
jax: 0.10.0
libtpu: 0.0.40
codegen_flags: <defaults>
</compile_context>

<pallas_src>
import jax
import jax.numpy as jnp
from jax import lax
from jax.experimental import pallas as pl
from jax.experimental.pallas import tpu as pltpu

GN_GROUPS = 32
GN_EPS = 1e-5


def _round_up(a, m):
    return (a + m - 1) // m * m


def _accurate_dot(a, b):
    """a @ b with ~f32 accuracy from two default-precision MXU passes.

    `b` is a one-hot matrix (exact in bf16); `a` is split into an exactly
    bf16-representable high part plus a residual, so the result is accurate to
    ~1e-5 relative regardless of the backend's default f32 matmul pass count.
    """
    a_hi = a.astype(jnp.bfloat16).astype(jnp.float32)
    a_lo = a - a_hi
    return (jnp.dot(a_hi, b, preferred_element_type=jnp.float32)
            + jnp.dot(a_lo, b, preferred_element_type=jnp.float32))


def dw_gn_swish_kernel(x_ref, w_ref, b_ref, gamma_ref, beta_ref,
                       c2g_ref, g2c_ref, o_ref, xp_ref):
    Bb, H, W, Cp = x_ref.shape
    Gt = c2g_ref.shape[1]
    cs = Cp // Gt

    # ---- zero only the 4 halo strips of the padded scratch (interior is
    #      fully overwritten below, so no full-tile zero fill) ----
    zrow = jnp.zeros((Bb, 1, W + 2, Cp), jnp.float32)
    zcol = jnp.zeros((Bb, H + 2, 1, Cp), jnp.float32)
    xp_ref[:, 0:1, :, :] = zrow
    xp_ref[:, H + 1:H + 2, :, :] = zrow
    xp_ref[:, :, 0:1, :] = zcol
    xp_ref[:, :, W + 1:W + 2, :] = zcol

    # ---- stage the input tile into the scratch interior (single full write) ----
    xp_ref[:, 1:H + 1, 1:W + 1, :] = x_ref[...]

    # ---- depthwise 3x3 conv: 9 shifted lane-broadcast FMAs, accumulated in
    #      3 independent row accumulators (pure VPU, no MXU / im2col) ----
    w = w_ref[...]                                               # (9, Cp)
    rows = []
    for dh in range(3):
        r = xp_ref[:, dh:dh + H, 0:W, :] * w[3 * dh:3 * dh + 1, :]
        r = r + xp_ref[:, dh:dh + H, 1:W + 1, :] * w[3 * dh + 1:3 * dh + 2, :]
        r = r + xp_ref[:, dh:dh + H, 2:W + 2, :] * w[3 * dh + 2:3 * dh + 3, :]
        rows.append(r)
    # stage conv result into the output buffer (no extra live (H,W,C) temp)
    o_ref[...] = (rows[0] + rows[1]) + (rows[2] + b_ref[...])    # (Bb,H,W,Cp)

    # ---- GroupNorm(32, C) statistics: per-channel sums, then a vectorised
    #      group reduce via tiny one-hot matmuls on the idle MXU ----
    h = o_ref[...]                                               # (Bb, H, W, Cp)
    s = jnp.sum(jnp.sum(h, axis=1), axis=1)                      # (Bb, Cp)
    ss = jnp.sum(jnp.sum(h * h, axis=1), axis=1)                 # (Bb, Cp)

    inv_n = 1.0 / float(H * W * cs)
    gsum = _accurate_dot(s, c2g_ref[...])                        # (Bb, Gt)
    gsq = _accurate_dot(ss, c2g_ref[...])                        # (Bb, Gt)
    mean_g = gsum * inv_n
    var_g = jnp.maximum(gsq * inv_n - mean_g * mean_g, 0.0)      # clamp >= 0
    rstd_g = lax.rsqrt(var_g + GN_EPS)

    mean_c = _accurate_dot(mean_g, g2c_ref[...])                 # (Bb, Cp)
    rstd_c = _accurate_dot(rstd_g, g2c_ref[...])                 # (Bb, Cp)
    scale_c = rstd_c * gamma_ref[...]                            # (Bb, Cp)
    shift_c = beta_ref[...] - mean_c * scale_c                   # (Bb, Cp)

    # ---- normalise + swish, in place in the output buffer ----
    for bi in range(Bb):                                         # static unroll
        z = o_ref[bi] * scale_c[bi:bi + 1, :] + shift_c[bi:bi + 1, :]
        sig = 0.5 * (jnp.tanh(0.5 * z) + 1.0)                    # EUP, no VALU divide
        o_ref[bi] = z * sig


def dw_bn_relu(x, H, W, params):
    """Forward of DW_bn_relu.  x: (B, N, C) float32, N == H*W -> (B, N, C)."""
    B, N, C = x.shape
    assert N == H * W
    assert C % GN_GROUPS == 0
    cs = C // GN_GROUPS

    # ---- lane-dense packing of P images along the channel axis (C < 128) ----
    P = 1
    if C < 128:
        P = min(max(128 // C, 1), B)
        while B % P:
            P -= 1
    Bp, Cp, Gt = B // P, C * P, GN_GROUPS * P

    xs = x.reshape(B, H, W, C)                    # NHWC view of the NCHW tensor (free)
    if P > 1:
        xs = xs.reshape(Bp, P, H, W, C).transpose(0, 2, 3, 1, 4).reshape(Bp, H, W, Cp)

    # ---- parameters, tiled across the packed channel axis ----
    w9 = jnp.tile(params["w_dw"].reshape(C, 9).T, (1, P))        # (9, Cp)
    b_dw = jnp.tile(params["b_dw"].reshape(1, C), (1, P))        # (1, Cp)
    gamma = jnp.tile(params["gamma"].reshape(1, C), (1, P))      # (1, Cp)
    beta = jnp.tile(params["beta"].reshape(1, C), (1, P))        # (1, Cp)

    # one-hot channel<->group maps for the vectorised GroupNorm reduction
    gid = jnp.arange(Cp, dtype=jnp.int32) // cs
    c2g = (gid[:, None] == jnp.arange(Gt, dtype=jnp.int32)[None, :]).astype(jnp.float32)
    g2c = c2g.T

    # ---- batch blocking: move >= ~0.5 MiB per grid step ----
    per_b = H * W * Cp * 4
    Bb = max(1, min(Bp, (512 * 1024) // per_b))
    while Bp % Bb:
        Bb -= 1

    # ---- VMEM budget from the actual footprint (double-buffered in/out blocks
    #      + physically-padded scratch + headroom for conv accumulators) ----
    lane = _round_up(Cp, 128)
    blk = Bb * H * _round_up(W, 8) * lane * 4
    scratch = Bb * (H + 2) * _round_up(W + 2, 8) * lane * 4
    vmem_limit = int(min(96 * 2**20, max(32 * 2**20, (7 * blk + scratch) * 1.25)))

    out = pl.pallas_call(
        dw_gn_swish_kernel,
        out_shape=jax.ShapeDtypeStruct((Bp, H, W, Cp), jnp.float32),
        grid_spec=pltpu.PrefetchScalarGridSpec(
            num_scalar_prefetch=0,
            grid=(Bp // Bb,),
            in_specs=[
                pl.BlockSpec((Bb, H, W, Cp), lambda b: (b, 0, 0, 0)),   # x
                pl.BlockSpec((9, Cp), lambda b: (0, 0)),                # dw weights
                pl.BlockSpec((1, Cp), lambda b: (0, 0)),                # dw bias
                pl.BlockSpec((1, Cp), lambda b: (0, 0)),                # gn gamma
                pl.BlockSpec((1, Cp), lambda b: (0, 0)),                # gn beta
                pl.BlockSpec((Cp, Gt), lambda b: (0, 0)),               # channel->group
                pl.BlockSpec((Gt, Cp), lambda b: (0, 0)),               # group->channel
            ],
            out_specs=pl.BlockSpec((Bb, H, W, Cp), lambda b: (b, 0, 0, 0)),
            scratch_shapes=[pltpu.VMEM((Bb, H + 2, W + 2, Cp), jnp.float32)],
        ),
        compiler_params=pltpu.CompilerParams(
            dimension_semantics=("parallel",),
            vmem_limit_bytes=vmem_limit),
    )(xs, w9, b_dw, gamma, beta, c2g, g2c)

    # ---- unpack back to (B, N, C) ----
    if P > 1:
        out = out.reshape(Bp, H, W, P, C).transpose(0, 3, 1, 2, 4).reshape(B, H, W, C)
    return out.reshape(B, N, C)


def init_params(key, C):
    kw, kb, kg, kbe = jax.random.split(key, 4)
    return {
        "w_dw": jax.random.normal(kw, (C, 3, 3), jnp.float32) * 0.25,
        "b_dw": jax.random.normal(kb, (C,), jnp.float32) * 0.1,
        "gamma": 1.0 + 0.1 * jax.random.normal(kg, (C,), jnp.float32),
        "beta": 0.1 * jax.random.normal(kbe, (C,), jnp.float32),
    }


def dw_bn_relu_reference(x, H, W, p):
    """Pure-JAX reference mirroring the PyTorch forward (independent code path)."""
    B, N, C = x.shape
    xn = x.transpose(0, 2, 1).reshape(B, C, H, W)                # NCHW, as in PyTorch
    w = p["w_dw"][:, None, :, :]                                 # (C, 1, 3, 3)
    y = lax.conv_general_dilated(
        xn, w, window_strides=(1, 1), padding=((1, 1), (1, 1)),
        feature_group_count=C,
        dimension_numbers=("NCHW", "OIHW", "NCHW"))
    y = y + p["b_dw"][None, :, None, None]
    cs = C // GN_GROUPS
    yg = y.reshape(B, GN_GROUPS, cs, H, W)
    mean = yg.mean(axis=(2, 3, 4), keepdims=True)
    var = yg.var(axis=(2, 3, 4), keepdims=True)
    hn = ((yg - mean) / jnp.sqrt(var + GN_EPS)).reshape(B, C, H, W)
    hn = hn * p["gamma"][None, :, None, None] + p["beta"][None, :, None, None]
    out = hn * jax.nn.sigmoid(hn)
    return out.reshape(B, C, N).transpose(0, 2, 1)


if __name__ == "__main__":
    # (B, C, H, W): small config from the spec, a batch-blocked one (Bb=2),
    # and a multi-grid-step one (grid=(2,)).
    configs = [
        (2, 64, 8, 8),     # packs 2 images along C -> Cp=128, Bb=1, grid=(1,)
        (4, 64, 16, 16),   # Cp=128, Bb=2 (two packed images per grid step)
        (4, 64, 32, 32),   # Cp=128, Bb=1, grid=(2,)
    ]
    key = jax.random.PRNGKey(0)
    for (B, C, H, W) in configs:
        key, kx, kp = jax.random.split(key, 3)
        x = jax.random.normal(kx, (B, H * W, C), jnp.float32)
        params = init_params(kp, C)

        out = jax.block_until_ready(dw_bn_relu(x, H, W, params))
        ref = dw_bn_relu_reference(x, H, W, params)

        assert out.shape == (B, H * W, C)
        assert jnp.allclose(out, ref, atol=2e-4, rtol=2e-4), \
            f"mismatch vs reference for config {(B, C, H, W)}"
    print("KERNEL_OK")
</pallas_src>

<mosaic_0001>
module attributes {stable_mosaic.version = 11 : i64} {
  func.func @dw_gn_swish_kernel(%arg0: i32, %arg1: memref<1x8x8x128xf32, #tpu.memory_space<vmem>>, %arg2: memref<9x128xf32, #tpu.memory_space<vmem>>, %arg3: memref<1x128xf32, #tpu.memory_space<vmem>>, %arg4: memref<1x128xf32, #tpu.memory_space<vmem>>, %arg5: memref<1x128xf32, #tpu.memory_space<vmem>>, %arg6: memref<128x64xf32, #tpu.memory_space<vmem>>, %arg7: memref<64x128xf32, #tpu.memory_space<vmem>>, %arg8: memref<1x8x8x128xf32, #tpu.memory_space<vmem>>, %arg9: memref<1x10x10x128xf32, #tpu.memory_space<vmem>>) attributes {dimension_semantics = [#tpu.dimension_semantics<parallel>], iteration_bounds = array<i64: 1>, scalar_prefetch = 0 : i64, scratch_operands = 1 : i64, tpu.core_type = #tpu.core_type<tc>, window_params = [{transform_indices = @transform_0, window_bounds = array<i64: 1, 8, 8, 128>}, {pipeline_mode = #tpu.pipeline_mode<synchronous>, transform_indices = @transform_1, window_bounds = array<i64: 9, 128>}, {pipeline_mode = #tpu.pipeline_mode<synchronous>, transform_indices = @transform_2, window_bounds = array<i64: 1, 128>}, {pipeline_mode = #tpu.pipeline_mode<synchronous>, transform_indices = @transform_3, window_bounds = array<i64: 1, 128>}, {pipeline_mode = #tpu.pipeline_mode<synchronous>, transform_indices = @transform_4, window_bounds = array<i64: 1, 128>}, {pipeline_mode = #tpu.pipeline_mode<synchronous>, transform_indices = @transform_5, window_bounds = array<i64: 128, 64>}, {pipeline_mode = #tpu.pipeline_mode<synchronous>, transform_indices = @transform_6, window_bounds = array<i64: 64, 128>}, {transform_indices = @transform_7, window_bounds = array<i64: 1, 8, 8, 128>}]} {
    %cst = arith.constant 0.000000e+00 : f32
    %0 = vector.broadcast %cst : f32 to vector<1x1x10x128xf32>
    %cst_0 = arith.constant 0.000000e+00 : f32
    %1 = vector.broadcast %cst_0 : f32 to vector<1x10x1x128xf32>
    %c0 = arith.constant 0 : index
    %c0_1 = arith.constant 0 : index
    %c0_2 = arith.constant 0 : index
    %c0_3 = arith.constant 0 : index
    %2 = vector.load %arg9[%c0, %c0_1, %c0_2, %c0_3] : memref<1x10x10x128xf32, #tpu.memory_space<vmem>>, vector<1x1x10x128xf32>
    tpu.vector_store %arg9[%c0, %c0_1, %c0_2, %c0_3], %0 {strides = array<i32>} : memref<1x10x10x128xf32, #tpu.memory_space<vmem>>, vector<1x1x10x128xf32>,
    %c0_4 = arith.constant 0 : index
    %c9 = arith.constant 9 : index
    %c0_5 = arith.constant 0 : index
    %c0_6 = arith.constant 0 : index
    %3 = vector.load %arg9[%c0_4, %c9, %c0_5, %c0_6] : memref<1x10x10x128xf32, #tpu.memory_space<vmem>>, vector<1x1x10x128xf32>
    tpu.vector_store %arg9[%c0_4, %c9, %c0_5, %c0_6], %0 {strides = array<i32>} : memref<1x10x10x128xf32, #tpu.memory_space<vmem>>, vector<1x1x10x128xf32>,
    %c0_7 = arith.constant 0 : index
    %c0_8 = arith.constant 0 : index
    %c0_9 = arith.constant 0 : index
    %c0_10 = arith.constant 0 : index
    %4 = vector.load %arg9[%c0_7, %c0_8, %c0_9, %c0_10] : memref<1x10x10x128xf32, #tpu.memory_space<vmem>>, vector<1x10x1x128xf32>
    tpu.vector_store %arg9[%c0_7, %c0_8, %c0_9, %c0_10], %1 {strides = array<i32>} : memref<1x10x10x128xf32, #tpu.memory_space<vmem>>, vector<1x10x1x128xf32>,
    %c0_11 = arith.constant 0 : index
    %c0_12 = arith.constant 0 : index
    %c9_13 = arith.constant 9 : index
    %c0_14 = arith.constant 0 : index
    %5 = vector.load %arg9[%c0_11, %c0_12, %c9_13, %c0_14] : memref<1x10x10x128xf32, #tpu.memory_space<vmem>>, vector<1x10x1x128xf32>
    tpu.vector_store %arg9[%c0_11, %c0_12, %c9_13, %c0_14], %1 {strides = array<i32>} : memref<1x10x10x128xf32, #tpu.memory_space<vmem>>, vector<1x10x1x128xf32>,
    %c0_15 = arith.constant 0 : index
    %c0_16 = arith.constant 0 : index
    %c0_17 = arith.constant 0 : index
    %c0_18 = arith.constant 0 : index
    %6 = vector.load %arg1[%c0_15, %c0_16, %c0_17, %c0_18] : memref<1x8x8x128xf32, #tpu.memory_space<vmem>>, vector<1x8x8x128xf32>
    %c0_19 = arith.constant 0 : index
    %c1 = arith.constant 1 : index
    %c1_20 = arith.constant 1 : index
    %c0_21 = arith.constant 0 : index
    %7 = vector.load %arg9[%c0_19, %c1, %c1_20, %c0_21] : memref<1x10x10x128xf32, #tpu.memory_space<vmem>>, vector<1x8x8x128xf32>
    tpu.vector_store %arg9[%c0_19, %c1, %c1_20, %c0_21], %6 {strides = array<i32>} : memref<1x10x10x128xf32, #tpu.memory_space<vmem>>, vector<1x8x8x128xf32>,
    %c0_22 = arith.constant 0 : index
    %c0_23 = arith.constant 0 : index
    %8 = vector.load %arg2[%c0_22, %c0_23] : memref<9x128xf32, #tpu.memory_space<vmem>>, vector<9x128xf32>
    %c0_24 = arith.constant 0 : index
    %c0_25 = arith.constant 0 : index
    %c0_26 = arith.constant 0 : index
    %c0_27 = arith.constant 0 : index
    %9 = vector.load %arg9[%c0_24, %c0_25, %c0_26, %c0_27] : memref<1x10x10x128xf32, #tpu.memory_space<vmem>>, vector<1x8x8x128xf32>
    %10 = vector.extract_strided_slice %8 {offsets = [0, 0], sizes = [1, 128], strides = [1, 1]} : vector<9x128xf32> to vector<1x128xf32>
    %11 = vector.shape_cast %10 : vector<1x128xf32> to vector<1x1x1x128xf32>
    %12 = vector.broadcast %11 : vector<1x1x1x128xf32> to vector<1x8x8x128xf32>
    %13 = arith.mulf %9, %12 : vector<1x8x8x128xf32>
    %c0_28 = arith.constant 0 : index
    %c0_29 = arith.constant 0 : index
    %c1_30 = arith.constant 1 : index
    %c0_31 = arith.constant 0 : index
    %14 = vector.load %arg9[%c0_28, %c0_29, %c1_30, %c0_31] : memref<1x10x10x128xf32, #tpu.memory_space<vmem>>, vector<1x8x8x128xf32>
    %15 = vector.extract_strided_slice %8 {offsets = [1, 0], sizes = [1, 128], strides = [1, 1]} : vector<9x128xf32> to vector<1x128xf32>
    %16 = vector.shape_cast %15 : vector<1x128xf32> to vector<1x1x1x128xf32>
    %17 = vector.broadcast %16 : vector<1x1x1x128xf32> to vector<1x8x8x128xf32>
    %18 = arith.mulf %14, %17 : vector<1x8x8x128xf32>
    %19 = arith.addf %13, %18 : vector<1x8x8x128xf32>
    %c0_32 = arith.constant 0 : index
    %c0_33 = arith.constant 0 : index
    %c2 = arith.constant 2 : index
    %c0_34 = arith.constant 0 : index
    %20 = vector.load %arg9[%c0_32, %c0_33, %c2, %c0_34] : memref<1x10x10x128xf32, #tpu.memory_space<vmem>>, vector<1x8x8x128xf32>
    %21 = vector.extract_strided_slice %8 {offsets = [2, 0], sizes = [1, 128], strides = [1, 1]} : vector<9x128xf32> to vector<1x128xf32>
    %22 = vector.shape_cast %21 : vector<1x128xf32> to vector<1x1x1x128xf32>
    %23 = vector.broadcast %22 : vector<1x1x1x128xf32> to vector<1x8x8x128xf32>
    %24 = arith.mulf %20, %23 : vector<1x8x8x128xf32>
    %25 = arith.addf %19, %24 : vector<1x8x8x128xf32>
    %c0_35 = arith.constant 0 : index
    %c1_36 = arith.constant 1 : index
    %c0_37 = arith.constant 0 : index
    %c0_38 = arith.constant 0 : index
    %26 = vector.load %arg9[%c0_35, %c1_36, %c0_37, %c0_38] : memref<1x10x10x128xf32, #tpu.memory_space<vmem>>, vector<1x8x8x128xf32>
    %27 = vector.extract_strided_slice %8 {offsets = [3, 0], sizes = [1, 128], strides = [1, 1]} : vector<9x128xf32> to vector<1x128xf32>
    %28 = vector.shape_cast %27 : vector<1x128xf32> to vector<1x1x1x128xf32>
    %29 = vector.broadcast %28 : vector<1x1x1x128xf32> to vector<1x8x8x128xf32>
    %30 = arith.mulf %26, %29 : vector<1x8x8x128xf32>
    %c0_39 = arith.constant 0 : index
    %c1_40 = arith.constant 1 : index
    %c1_41 = arith.constant 1 : index
    %c0_42 = arith.constant 0 : index
    %31 = vector.load %arg9[%c0_39, %c1_40, %c1_41, %c0_42] : memref<1x10x10x128xf32, #tpu.memory_space<vmem>>, vector<1x8x8x128xf32>
    %32 = vector.extract_strided_slice %8 {offsets = [4, 0], sizes = [1, 128], strides = [1, 1]} : vector<9x128xf32> to vector<1x128xf32>
    %33 = vector.shape_cast %32 : vector<1x128xf32> to vector<1x1x1x128xf32>
    %34 = vector.broadcast %33 : vector<1x1x1x128xf32> to vector<1x8x8x128xf32>
    %35 = arith.mulf %31, %34 : vector<1x8x8x128xf32>
    %36 = arith.addf %30, %35 : vector<1x8x8x128xf32>
    %c0_43 = arith.constant 0 : index
    %c1_44 = arith.constant 1 : index
    %c2_45 = arith.constant 2 : index
    %c0_46 = arith.constant 0 : index
    %37 = vector.load %arg9[%c0_43, %c1_44, %c2_45, %c0_46] : memref<1x10x10x128xf32, #tpu.memory_space<vmem>>, vector<1x8x8x128xf32>
    %38 = vector.extract_strided_slice %8 {offsets = [5, 0], sizes = [1, 128], strides = [1, 1]} : vector<9x128xf32> to vector<1x128xf32>
    %39 = vector.shape_cast %38 : vector<1x128xf32> to vector<1x1x1x128xf32>
    %40 = vector.broadcast %39 : vector<1x1x1x128xf32> to vector<1x8x8x128xf32>
    %41 = arith.mulf %37, %40 : vector<1x8x8x128xf32>
    %42 = arith.addf %36, %41 : vector<1x8x8x128xf32>
    %c0_47 = arith.constant 0 : index
    %c2_48 = arith.constant 2 : index
    %c0_49 = arith.constant 0 : index
    %c0_50 = arith.constant 0 : index
    %43 = vector.load %arg9[%c0_47, %c2_48, %c0_49, %c0_50] : memref<1x10x10x128xf32, #tpu.memory_space<vmem>>, vector<1x8x8x128xf32>
    %44 = vector.extract_strided_slice %8 {offsets = [6, 0], sizes = [1, 128], strides = [1, 1]} : vector<9x128xf32> to vector<1x128xf32>
    %45 = vector.shape_cast %44 : vector<1x128xf32> to vector<1x1x1x128xf32>
    %46 = vector.broadcast %45 : vector<1x1x1x128xf32> to vector<1x8x8x128xf32>
    %47 = arith.mulf %43, %46 : vector<1x8x8x128xf32>
    %c0_51 = arith.constant 0 : index
    %c2_52 = arith.constant 2 : index
    %c1_53 = arith.constant 1 : index
    %c0_54 = arith.constant 0 : index
    %48 = vector.load %arg9[%c0_51, %c2_52, %c1_53, %c0_54] : memref<1x10x10x128xf32, #tpu.memory_space<vmem>>, vector<1x8x8x128xf32>
    %49 = vector.extract_strided_slice %8 {offsets = [7, 0], sizes = [1, 128], strides = [1, 1]} : vector<9x128xf32> to vector<1x128xf32>
    %50 = vector.shape_cast %49 : vector<1x128xf32> to vector<1x1x1x128xf32>
    %51 = vector.broadcast %50 : vector<1x1x1x128xf32> to vector<1x8x8x128xf32>
    %52 = arith.mulf %48, %51 : vector<1x8x8x128xf32>
    %53 = arith.addf %47, %52 : vector<1x8x8x128xf32>
    %c0_55 = arith.constant 0 : index
    %c2_56 = arith.constant 2 : index
    %c2_57 = arith.constant 2 : index
    %c0_58 = arith.constant 0 : index
    %54 = vector.load %arg9[%c0_55, %c2_56, %c2_57, %c0_58] : memref<1x10x10x128xf32, #tpu.memory_space<vmem>>, vector<1x8x8x128xf32>
    %55 = vector.extract_strided_slice %8 {offsets = [8, 0], sizes = [1, 128], strides = [1, 1]} : vector<9x128xf32> to vector<1x128xf32>
    %56 = vector.shape_cast %55 : vector<1x128xf32> to vector<1x1x1x128xf32>
    %57 = vector.broadcast %56 : vector<1x1x1x128xf32> to vector<1x8x8x128xf32>
    %58 = arith.mulf %54, %57 : vector<1x8x8x128xf32>
    %59 = arith.addf %53, %58 : vector<1x8x8x128xf32>
    %60 = arith.addf %25, %42 : vector<1x8x8x128xf32>
    %c0_59 = arith.constant 0 : index
    %c0_60 = arith.constant 0 : index
    %61 = vector.load %arg3[%c0_59, %c0_60] : memref<1x128xf32, #tpu.memory_space<vmem>>, vector<1x128xf32>
    %62 = vector.shape_cast %61 : vector<1x128xf32> to vector<1x1x1x128xf32>
    %63 = vector.broadcast %62 : vector<1x1x1x128xf32> to vector<1x8x8x128xf32>
    %64 = arith.addf %59, %63 : vector<1x8x8x128xf32>
    %65 = arith.addf %60, %64 : vector<1x8x8x128xf32>
    %c0_61 = arith.constant 0 : index
    %c0_62 = arith.constant 0 : index
    %c0_63 = arith.constant 0 : index
    %c0_64 = arith.constant 0 : index
    %66 = vector.load %arg8[%c0_61, %c0_62, %c0_63, %c0_64] : memref<1x8x8x128xf32, #tpu.memory_space<vmem>>, vector<1x8x8x128xf32>
    tpu.vector_store %arg8[%c0_61, %c0_62, %c0_63, %c0_64], %65 {strides = array<i32>} : memref<1x8x8x128xf32, #tpu.memory_space<vmem>>, vector<1x8x8x128xf32>,
    %c0_65 = arith.constant 0 : index
    %c0_66 = arith.constant 0 : index
    %c0_67 = arith.constant 0 : index
    %c0_68 = arith.constant 0 : index
    %67 = vector.load %arg8[%c0_65, %c0_66, %c0_67, %c0_68] : memref<1x8x8x128xf32, #tpu.memory_space<vmem>>, vector<1x8x8x128xf32>
    %cst_69 = arith.constant dense<0.000000e+00> : vector<1x8x128xf32>
    %68 = vector.multi_reduction <add>, %67, %cst_69 [1] : vector<1x8x8x128xf32> to vector<1x8x128xf32>
    %cst_70 = arith.constant dense<0.000000e+00> : vector<1x128xf32>
    %69 = vector.multi_reduction <add>, %68, %cst_70 [1] : vector<1x8x128xf32> to vector<1x128xf32>
    %70 = arith.mulf %67, %67 : vector<1x8x8x128xf32>
    %cst_71 = arith.constant dense<0.000000e+00> : vector<1x8x128xf32>
    %71 = vector.multi_reduction <add>, %70, %cst_71 [1] : vector<1x8x8x128xf32> to vector<1x8x128xf32>
    %cst_72 = arith.constant dense<0.000000e+00> : vector<1x128xf32>
    %72 = vector.multi_reduction <add>, %71, %cst_72 [1] : vector<1x8x128xf32> to vector<1x128xf32>
    %c0_73 = arith.constant 0 : index
    %c0_74 = arith.constant 0 : index
    %73 = vector.load %arg6[%c0_73, %c0_74] : memref<128x64xf32, #tpu.memory_space<vmem>>, vector<128x64xf32>
    %74 = arith.truncf %69 : vector<1x128xf32> to vector<1x128xbf16>
    %75 = arith.extf %74 : vector<1x128xbf16> to vector<1x128xf32>
    %76 = arith.subf %69, %75 : vector<1x128xf32>
    %cst_75 = arith.constant dense<0.000000e+00> : vector<1x64xf32>
    %77 = tpu.matmul %75, %73, %cst_75 {dimension_numbers = #tpu.dot_dimension_numbers<[1], [0], [0], [1], [0, 0, 1, 1], [], []>} : vector<1x128xf32>, vector<128x64xf32>, vector<1x64xf32> -> vector<1x64xf32>
    %cst_76 = arith.constant dense<0.000000e+00> : vector<1x64xf32>
    %78 = tpu.matmul %76, %73, %cst_76 {dimension_numbers = #tpu.dot_dimension_numbers<[1], [0], [0], [1], [0, 0, 1, 1], [], []>} : vector<1x128xf32>, vector<128x64xf32>, vector<1x64xf32> -> vector<1x64xf32>
    %79 = arith.addf %77, %78 : vector<1x64xf32>
    %c0_77 = arith.constant 0 : index
    %c0_78 = arith.constant 0 : index
    %80 = vector.load %arg6[%c0_77, %c0_78] : memref<128x64xf32, #tpu.memory_space<vmem>>, vector<128x64xf32>
    %81 = arith.truncf %72 : vector<1x128xf32> to vector<1x128xbf16>
    %82 = arith.extf %81 : vector<1x128xbf16> to vector<1x128xf32>
    %83 = arith.subf %72, %82 : vector<1x128xf32>
    %cst_79 = arith.constant dense<0.000000e+00> : vector<1x64xf32>
    %84 = tpu.matmul %82, %80, %cst_79 {dimension_numbers = #tpu.dot_dimension_numbers<[1], [0], [0], [1], [0, 0, 1, 1], [], []>} : vector<1x128xf32>, vector<128x64xf32>, vector<1x64xf32> -> vector<1x64xf32>
    %cst_80 = arith.constant dense<0.000000e+00> : vector<1x64xf32>
    %85 = tpu.matmul %83, %80, %cst_80 {dimension_numbers = #tpu.dot_dimension_numbers<[1], [0], [0], [1], [0, 0, 1, 1], [], []>} : vector<1x128xf32>, vector<128x64xf32>, vector<1x64xf32> -> vector<1x64xf32>
    %86 = arith.addf %84, %85 : vector<1x64xf32>
    %cst_81 = arith.constant 7.812500e-03 : f32
    %87 = vector.broadcast %cst_81 : f32 to vector<1x64xf32>
    %88 = arith.mulf %79, %87 : vector<1x64xf32>
    %cst_82 = arith.constant 7.812500e-03 : f32
    %89 = vector.broadcast %cst_82 : f32 to vector<1x64xf32>
    %90 = arith.mulf %86, %89 : vector<1x64xf32>
    %91 = arith.mulf %88, %88 : vector<1x64xf32>
    %92 = arith.subf %90, %91 : vector<1x64xf32>
    %cst_83 = arith.constant 0.000000e+00 : f32
    %93 = vector.broadcast %cst_83 : f32 to vector<1x64xf32>
    %94 = arith.maximumf %92, %93 : vector<1x64xf32>
    %cst_84 = arith.constant 9.99999974E-6 : f32
    %95 = vector.broadcast %cst_84 : f32 to vector<1x64xf32>
    %96 = arith.addf %94, %95 : vector<1x64xf32>
    %97 = math.rsqrt %96 : vector<1x64xf32>
    %c0_85 = arith.constant 0 : index
    %c0_86 = arith.constant 0 : index
    %98 = vector.load %arg7[%c0_85, %c0_86] : memref<64x128xf32, #tpu.memory_space<vmem>>, vector<64x128xf32>
    %99 = arith.truncf %88 : vector<1x64xf32> to vector<1x64xbf16>
    %100 = arith.extf %99 : vector<1x64xbf16> to vector<1x64xf32>
    %101 = arith.subf %88, %100 : vector<1x64xf32>
    %cst_87 = arith.constant dense<0.000000e+00> : vector<1x128xf32>
    %102 = tpu.matmul %100, %98, %cst_87 {dimension_numbers = #tpu.dot_dimension_numbers<[1], [0], [0], [1], [0, 0, 1, 1], [], []>} : vector<1x64xf32>, vector<64x128xf32>, vector<1x128xf32> -> vector<1x128xf32>
    %cst_88 = arith.constant dense<0.000000e+00> : vector<1x128xf32>
    %103 = tpu.matmul %101, %98, %cst_88 {dimension_numbers = #tpu.dot_dimension_numbers<[1], [0], [0], [1], [0, 0, 1, 1], [], []>} : vector<1x64xf32>, vector<64x128xf32>, vector<1x128xf32> -> vector<1x128xf32>
    %104 = arith.addf %102, %103 : vector<1x128xf32>
    %c0_89 = arith.constant 0 : index
    %c0_90 = arith.constant 0 : index
    %105 = vector.load %arg7[%c0_89, %c0_90] : memref<64x128xf32, #tpu.memory_space<vmem>>, vector<64x128xf32>
    %106 = arith.truncf %97 : vector<1x64xf32> to vector<1x64xbf16>
    %107 = arith.extf %106 : vector<1x64xbf16> to vector<1x64xf32>
    %108 = arith.subf %97, %107 : vector<1x64xf32>
    %cst_91 = arith.constant dense<0.000000e+00> : vector<1x128xf32>
    %109 = tpu.matmul %107, %105, %cst_91 {dimension_numbers = #tpu.dot_dimension_numbers<[1], [0], [0], [1], [0, 0, 1, 1], [], []>} : vector<1x64xf32>, vector<64x128xf32>, vector<1x128xf32> -> vector<1x128xf32>
    %cst_92 = arith.constant dense<0.000000e+00> : vector<1x128xf32>
    %110 = tpu.matmul %108, %105, %cst_92 {dimension_numbers = #tpu.dot_dimension_numbers<[1], [0], [0], [1], [0, 0, 1, 1], [], []>} : vector<1x64xf32>, vector<64x128xf32>, vector<1x128xf32> -> vector<1x128xf32>
    %111 = arith.addf %109, %110 : vector<1x128xf32>
    %c0_93 = arith.constant 0 : index
    %c0_94 = arith.constant 0 : index
    %112 = vector.load %arg4[%c0_93, %c0_94] : memref<1x128xf32, #tpu.memory_space<vmem>>, vector<1x128xf32>
    %113 = arith.mulf %111, %112 : vector<1x128xf32>
    %c0_95 = arith.constant 0 : index
    %c0_96 = arith.constant 0 : index
    %114 = vector.load %arg5[%c0_95, %c0_96] : memref<1x128xf32, #tpu.memory_space<vmem>>, vector<1x128xf32>
    %115 = arith.mulf %104, %113 : vector<1x128xf32>
    %116 = arith.subf %114, %115 : vector<1x128xf32>
    %c0_97 = arith.constant 0 : index
    %c0_98 = arith.constant 0 : index
    %c0_99 = arith.constant 0 : index
    %c0_100 = arith.constant 0 : index
    %117 = vector.load %arg8[%c0_97, %c0_98, %c0_99, %c0_100] : memref<1x8x8x128xf32, #tpu.memory_space<vmem>>, vector<1x8x8x128xf32>
    %118 = vector.shape_cast %117 : vector<1x8x8x128xf32> to vector<8x8x128xf32>
    %119 = vector.shape_cast %113 : vector<1x128xf32> to vector<1x1x128xf32>
    %120 = vector.broadcast %119 : vector<1x1x128xf32> to vector<8x8x128xf32>
    %121 = arith.mulf %118, %120 : vector<8x8x128xf32>
    %122 = vector.shape_cast %116 : vector<1x128xf32> to vector<1x1x128xf32>
    %123 = vector.broadcast %122 : vector<1x1x128xf32> to vector<8x8x128xf32>
    %124 = arith.addf %121, %123 : vector<8x8x128xf32>
    %cst_101 = arith.constant 5.000000e-01 : f32
    %125 = vector.broadcast %cst_101 : f32 to vector<8x8x128xf32>
    %126 = arith.mulf %125, %124 : vector<8x8x128xf32>
    %127 = math.tanh %126 : vector<8x8x128xf32>
    %cst_102 = arith.constant 1.000000e+00 : f32
    %128 = vector.broadcast %cst_102 : f32 to vector<8x8x128xf32>
    %129 = arith.addf %127, %128 : vector<8x8x128xf32>
    %cst_103 = arith.constant 5.000000e-01 : f32
    %130 = vector.broadcast %cst_103 : f32 to vector<8x8x128xf32>
    %131 = arith.mulf %130, %129 : vector<8x8x128xf32>
    %132 = arith.mulf %124, %131 : vector<8x8x128xf32>
    %c0_104 = arith.constant 0 : index
    %c0_105 = arith.constant 0 : index
    %c0_106 = arith.constant 0 : index
    %c0_107 = arith.constant 0 : index
    %133 = vector.load %arg8[%c0_104, %c0_105, %c0_106, %c0_107] : memref<1x8x8x128xf32, #tpu.memory_space<vmem>>, vector<1x8x8x128xf32>
    %134 = vector.shape_cast %133 : vector<1x8x8x128xf32> to vector<8x8x128xf32>
    %135 = vector.shape_cast %132 : vector<8x8x128xf32> to vector<1x8x8x128xf32>
    tpu.vector_store %arg8[%c0_104, %c0_105, %c0_106, %c0_107], %135 {strides = array<i32>} : memref<1x8x8x128xf32, #tpu.memory_space<vmem>>, vector<1x8x8x128xf32>,
    return
  }
  func.func @transform_0(%arg0: i32) -> (i32, i32, i32, i32) {
    %c0_i32 = arith.constant 0 : i32
    %c0_i32_0 = arith.constant 0 : i32
    %c0_i32_1 = arith.constant 0 : i32
    %c0_i32_2 = arith.constant 0 : i32
    return %arg0, %c0_i32, %c0_i32_0, %c0_i32_1 : i32, i32, i32, i32
  }
  func.func @transform_1(%arg0: i32) -> (i32, i32) {
    %c0_i32 = arith.constant 0 : i32
    %c0_i32_0 = arith.constant 0 : i32
    %c0_i32_1 = arith.constant 0 : i32
    return %c0_i32, %c0_i32_0 : i32, i32
  }
  func.func @transform_2(%arg0: i32) -> (i32, i32) {
    %c0_i32 = arith.constant 0 : i32
    %c0_i32_0 = arith.constant 0 : i32
    %c0_i32_1 = arith.constant 0 : i32
    return %c0_i32, %c0_i32_0 : i32, i32
  }
  func.func @transform_3(%arg0: i32) -> (i32, i32) {
    %c0_i32 = arith.constant 0 : i32
    %c0_i32_0 = arith.constant 0 : i32
    %c0_i32_1 = arith.constant 0 : i32
    return %c0_i32, %c0_i32_0 : i32, i32
  }
  func.func @transform_4(%arg0: i32) -> (i32, i32) {
    %c0_i32 = arith.constant 0 : i32
    %c0_i32_0 = arith.constant 0 : i32
    %c0_i32_1 = arith.constant 0 : i32
    return %c0_i32, %c0_i32_0 : i32, i32
  }
  func.func @transform_5(%arg0: i32) -> (i32, i32) {
    %c0_i32 = arith.constant 0 : i32
    %c0_i32_0 = arith.constant 0 : i32
    %c0_i32_1 = arith.constant 0 : i32
    return %c0_i32, %c0_i32_0 : i32, i32
  }
  func.func @transform_6(%arg0: i32) -> (i32, i32) {
    %c0_i32 = arith.constant 0 : i32
    %c0_i32_0 = arith.constant 0 : i32
    %c0_i32_1 = arith.constant 0 : i32
    return %c0_i32, %c0_i32_0 : i32, i32
  }
  func.func @transform_7(%arg0: i32) -> (i32, i32, i32, i32) {
    %c0_i32 = arith.constant 0 : i32
    %c0_i32_0 = arith.constant 0 : i32
    %c0_i32_1 = arith.constant 0 : i32
    %c0_i32_2 = arith.constant 0 : i32
    return %arg0, %c0_i32, %c0_i32_0, %c0_i32_1 : i32, i32, i32, i32
  }
}

</mosaic_0001>

<llo_original>
// kernel: tpu_custom_call.1
$region0: #{tpu_custom_call.1}
  #allocation0 [shape = 'u32[]', space=smem, size = 0x4, offset = 0x4, fixed_abs, tag = 'smem constant byte address 0x4 - core index']
  #allocation1 [shape = 'u32[144,128]{1,0:T(1,128)}', space=vmem, size = 0x12000, scoped, tag = 'internal scratch']
  #allocation2 [shape = 'f32[1,10,10,128]{3,2,1,0:T(8,128)}', space=vmem, size = 0x14000, scoped, tag = 'scratch operand']
  %s0 = inlined_call_operand.vmem [shape: f32[1,8,8,128], index: 0, kind: input, shape index: {}]
  %s1 = inlined_call_operand.vmem [shape: f32[9,128], index: 1, kind: input, shape index: {}]
  %s2 = inlined_call_operand.vmem [shape: f32[1,128], index: 2, kind: input, shape index: {}]
  %s3 = inlined_call_operand.vmem [shape: f32[1,128], index: 3, kind: input, shape index: {}]
  %s4 = inlined_call_operand.vmem [shape: f32[1,128], index: 4, kind: input, shape index: {}]
  %s5 = inlined_call_operand.vmem [shape: f32[128,64], index: 5, kind: input, shape index: {}]
  %s6 = inlined_call_operand.vmem [shape: f32[64,128], index: 6, kind: input, shape index: {}]
  %s7 = inlined_call_operand.hbm [shape: f32[1,8,8,128], index: 7, kind: output, shape index: {}]
  %s8 = sld [smem:[#allocation0]]
  $region38: #{tpu_custom_call.1} parent=0
    _
  %s10 = ssub.s32 1, %s8
  %s11 = scalar_select 0, %s10, %s8
  $region1: #{tpu_custom_call.1} parent=0
    #allocation3 [shape = 'u8[32768]{0}', space=vmem, size = 0x8000, scoped, tag = 'output window, operand 0, single buffered']
    #allocation4 [shape = 's32[1]{0}', space=sflag, size = 0x4, scoped, tag = 'scoped memory for tpu_custom_call.1']
    %12 = vsyncpa [#allocation4], 0
    // Predicated region
    $region2: #{tpu_custom_call.1} parent=1 // pred_check
      _
    $region3: #{tpu_custom_call.1} parent=1 // pred_check_branch
      %14 = sbr.rel (0) target = $region5
    $region4: #{tpu_custom_call.1} parent=1 // pred_region
      _
    $region5: #{tpu_custom_call.1} parent=1 // pred_fallthru
      _
    // Predicated region
    $region6: #{tpu_custom_call.1} parent=1 // pred_check
      _
    $region7: #{tpu_custom_call.1} parent=1 // pred_check_branch
      %16 = sbr.rel (0) target = $region9
    $region8: #{tpu_custom_call.1} parent=1 // pred_region
      _
    $region9: #{tpu_custom_call.1} parent=1 // pred_fallthru
      _
    // Predicated region
    $region10: #{tpu_custom_call.1} parent=1 // pred_check
      _
    $region11: #{tpu_custom_call.1} parent=1 // pred_check_branch
      %18 = sbr.rel (0) target = $region13
    $region12: #{tpu_custom_call.1} parent=1 // pred_region
      _
    $region13: #{tpu_custom_call.1} parent=1 // pred_fallthru
      _
    // Predicated region
    $region14: #{tpu_custom_call.1} parent=1 // pred_check
      _
    $region15: #{tpu_custom_call.1} parent=1 // pred_check_branch
      %20 = sbr.rel (0) target = $region17
    $region16: #{tpu_custom_call.1} parent=1 // pred_region
      _
    $region17: #{tpu_custom_call.1} parent=1 // pred_fallthru
      _
    // Predicated region
    $region18: #{tpu_custom_call.1} parent=1 // pred_check
      _
    $region19: #{tpu_custom_call.1} parent=1 // pred_check_branch
      %22 = sbr.rel (0) target = $region21
    $region20: #{tpu_custom_call.1} parent=1 // pred_region
      _
    $region21: #{tpu_custom_call.1} parent=1 // pred_fallthru
      _
    // Predicated region
    $region22: #{tpu_custom_call.1} parent=1 // pred_check
      _
    $region23: #{tpu_custom_call.1} parent=1 // pred_check_branch
      %24 = sbr.rel (0) target = $region25
    $region24: #{tpu_custom_call.1} parent=1 // pred_region
      _
    $region25: #{tpu_custom_call.1} parent=1 // pred_fallthru
      _
    // Predicated region
    $region26: #{tpu_custom_call.1} parent=1 // pred_check
      _
    $region27: #{tpu_custom_call.1} parent=1 // pred_check_branch
      %26 = sbr.rel (0) target = $region29
    $region28: #{tpu_custom_call.1} parent=1 // pred_region
      _
    $region29: #{tpu_custom_call.1} parent=1 // pred_fallthru
      _
    %27 = vst [vmem:[#allocation2] sm:$0xff] 0.0
    %28 = vst [vmem:[#allocation2 + $0x8] sm:$0x3] 0.0
    %s29 = scalar_lea.vmem [#allocation2], 144
    %30 = vst [vmem:[%s29] sm:$0xff] 0.0
    %31 = vst [vmem:[%s29 + $0x8] sm:$0x3] 0.0
    %32 = vst [vmem:[#allocation2] sm:$0x1] 0.0
    %33 = vst [vmem:[#allocation2 + $0x10] sm:$0x1] 0.0
    %34 = vst [vmem:[#allocation2 + $0x20] sm:$0x1] 0.0
    %35 = vst [vmem:[#allocation2 + $0x30] sm:$0x1] 0.0
    %36 = vst [vmem:[#allocation2 + $0x40] sm:$0x1] 0.0
    %37 = vst [vmem:[#allocation2 + $0x50] sm:$0x1] 0.0
    %38 = vst [vmem:[#allocation2 + $0x60] sm:$0x1] 0.0
    %39 = vst [vmem:[#allocation2 + $0x70] sm:$0x1] 0.0
    %40 = vst [vmem:[#allocation2 + $0x80] sm:$0x1] 0.0
    %41 = vst [vmem:[#allocation2 + $0x90] sm:$0x1] 0.0
    %42 = vst [vmem:[#allocation2 + $0x9] sm:$0x1] 0.0
    %43 = vst [vmem:[#allocation2 + $0x19] sm:$0x1] 0.0
    %44 = vst [vmem:[#allocation2 + $0x29] sm:$0x1] 0.0
    %45 = vst [vmem:[#allocation2 + $0x39] sm:$0x1] 0.0
    %46 = vst [vmem:[#allocation2 + $0x49] sm:$0x1] 0.0
    %47 = vst [vmem:[#allocation2 + $0x59] sm:$0x1] 0.0
    %48 = vst [vmem:[#allocation2 + $0x69] sm:$0x1] 0.0
    %49 = vst [vmem:[#allocation2 + $0x79] sm:$0x1] 0.0
    %50 = vst [vmem:[#allocation2 + $0x89] sm:$0x1] 0.0
    %51 = vst [vmem:[#allocation2 + $0x99] sm:$0x1] 0.0
    %v52 = vld [vmem:[%s0] sm:$0xff]
    %v53 = vld [vmem:[%s0 + $0x8] sm:$0xff]
    %v54 = vld [vmem:[%s0 + $0x10] sm:$0xff]
    %v55 = vld [vmem:[%s0 + $0x18] sm:$0xff]
    %v56 = vld [vmem:[%s0 + $0x20] sm:$0xff]
    %v57 = vld [vmem:[%s0 + $0x28] sm:$0xff]
    %v58 = vld [vmem:[%s0 + $0x30] sm:$0xff]
    %v59 = vld [vmem:[%s0 + $0x38] sm:$0xff]
    %s60 = scalar_lea.vmem [#allocation2], 16
    %61 = vst [vmem:[%s60 + $0x1] sm:$0xff] %v52
    %62 = vst [vmem:[%s60 + $0x11] sm:$0xff] %v53
    %63 = vst [vmem:[%s60 + $0x21] sm:$0xff] %v54
    %64 = vst [vmem:[%s60 + $0x31] sm:$0xff] %v55
    %65 = vst [vmem:[%s60 + $0x41] sm:$0xff] %v56
    %66 = vst [vmem:[%s60 + $0x51] sm:$0xff] %v57
    %67 = vst [vmem:[%s60 + $0x61] sm:$0xff] %v58
    %68 = vst [vmem:[%s60 + $0x71] sm:$0xff] %v59
    %v69 = vld [vmem:[%s1] sm:$0xff]
    %v70 = vld [vmem:[%s1 + $0x8] sm:$0x1]
    %v71 = vld [vmem:[#allocation2] sm:$0xff]
    %v72 = vld [vmem:[#allocation2 + $0x10] sm:$0xff]
    %v73 = vld [vmem:[#allocation2 + $0x20] sm:$0xff]
    %v74 = vld [vmem:[#allocation2 + $0x30] sm:$0xff]
    %v75 = vld [vmem:[#allocation2 + $0x40] sm:$0xff]
    %v76 = vld [vmem:[#allocation2 + $0x50] sm:$0xff]
    %v77 = vld [vmem:[#allocation2 + $0x60] sm:$0xff]
    %v78 = vld [vmem:[#allocation2 + $0x70] sm:$0xff]
    %v79 = vlaneseq
    %v80 = vshrl.u32 %v79, 7
    %v81 = vsub.s32 0, %v80
    %v82 = vrot.slane %v69, %v81
    %v83 = vmul.f32 %v71, %v82
    %v84 = vmul.f32 %v72, %v82
    %v85 = vmul.f32 %v73, %v82
    %v86 = vmul.f32 %v74, %v82
    %v87 = vmul.f32 %v75, %v82
    %v88 = vmul.f32 %v76, %v82
    %v89 = vmul.f32 %v77, %v82
    %v90 = vmul.f32 %v78, %v82
    %v91 = vld [vmem:[#allocation2 + $0x1] sm:$0xff]
    %v92 = vld [vmem:[#allocation2 + $0x11] sm:$0xff]
    %v93 = vld [vmem:[#allocation2 + $0x21] sm:$0xff]
    %v94 = vld [vmem:[#allocation2 + $0x31] sm:$0xff]
    %v95 = vld [vmem:[#allocation2 + $0x41] sm:$0xff]
    %v96 = vld [vmem:[#allocation2 + $0x51] sm:$0xff]
    %v97 = vld [vmem:[#allocation2 + $0x61] sm:$0xff]
    %v98 = vld [vmem:[#allocation2 + $0x71] sm:$0xff]
    %v99 = vlaneseq
    %v100 = vshrl.u32 %v99, 7
    %v101 = vsub.s32 1, %v100
    %v102 = vrot.slane %v69, %v101
    %v103 = vmul.f32 %v91, %v102
    %v104 = vmul.f32 %v92, %v102
    %v105 = vmul.f32 %v93, %v102
    %v106 = vmul.f32 %v94, %v102
    %v107 = vmul.f32 %v95, %v102
    %v108 = vmul.f32 %v96, %v102
    %v109 = vmul.f32 %v97, %v102
    %v110 = vmul.f32 %v98, %v102
    %v111 = vadd.f32 %v83, %v103
    %v112 = vadd.f32 %v84, %v104
    %v113 = vadd.f32 %v85, %v105
    %v114 = vadd.f32 %v86, %v106
    %v115 = vadd.f32 %v87, %v107
    %v116 = vadd.f32 %v88, %v108
    %v117 = vadd.f32 %v89, %v109
    %v118 = vadd.f32 %v90, %v110
    %v119 = vld [vmem:[#allocation2 + $0x2] sm:$0xff]
    %v120 = vld [vmem:[#allocation2 + $0x12] sm:$0xff]
    %v121 = vld [vmem:[#allocation2 + $0x22] sm:$0xff]
    %v122 = vld [vmem:[#allocation2 + $0x32] sm:$0xff]
    %v123 = vld [vmem:[#allocation2 + $0x42] sm:$0xff]
    %v124 = vld [vmem:[#allocation2 + $0x52] sm:$0xff]
    %v125 = vld [vmem:[#allocation2 + $0x62] sm:$0xff]
    %v126 = vld [vmem:[#allocation2 + $0x72] sm:$0xff]
    %v127 = vlaneseq
    %v128 = vshrl.u32 %v127, 7
    %v129 = vsub.s32 2, %v128
    %v130 = vrot.slane %v69, %v129
    %v131 = vmul.f32 %v119, %v130
    %v132 = vmul.f32 %v120, %v130
    %v133 = vmul.f32 %v121, %v130
    %v134 = vmul.f32 %v122, %v130
    %v135 = vmul.f32 %v123, %v130
    %v136 = vmul.f32 %v124, %v130
    %v137 = vmul.f32 %v125, %v130
    %v138 = vmul.f32 %v126, %v130
    %v139 = vadd.f32 %v111, %v131
    %v140 = vadd.f32 %v112, %v132
    %v141 = vadd.f32 %v113, %v133
    %v142 = vadd.f32 %v114, %v134
    %v143 = vadd.f32 %v115, %v135
    %v144 = vadd.f32 %v116, %v136
    %v145 = vadd.f32 %v117, %v137
    %v146 = vadd.f32 %v118, %v138
    %v147 = vld [vmem:[%s60] sm:$0xff]
    %v148 = vld [vmem:[%s60 + $0x10] sm:$0xff]
    %v149 = vld [vmem:[%s60 + $0x20] sm:$0xff]
    %v150 = vld [vmem:[%s60 + $0x30] sm:$0xff]
    %v151 = vld [vmem:[%s60 + $0x40] sm:$0xff]
    %v152 = vld [vmem:[%s60 + $0x50] sm:$0xff]
    %v153 = vld [vmem:[%s60 + $0x60] sm:$0xff]
    %v154 = vld [vmem:[%s60 + $0x70] sm:$0xff]
    %v155 = vlaneseq
    %v156 = vshrl.u32 %v155, 7
    %v157 = vsub.s32 3, %v156
    %v158 = vrot.slane %v69, %v157
    %v159 = vmul.f32 %v147, %v158
    %v160 = vmul.f32 %v148, %v158
    %v161 = vmul.f32 %v149, %v158
    %v162 = vmul.f32 %v150, %v158
    %v163 = vmul.f32 %v151, %v158
    %v164 = vmul.f32 %v152, %v158
    %v165 = vmul.f32 %v153, %v158
    %v166 = vmul.f32 %v154, %v158
    %v167 = vld [vmem:[%s60 + $0x1] sm:$0xff]
    %v168 = vld [vmem:[%s60 + $0x11] sm:$0xff]
    %v169 = vld [vmem:[%s60 + $0x21] sm:$0xff]
    %v170 = vld [vmem:[%s60 + $0x31] sm:$0xff]
    %v171 = vld [vmem:[%s60 + $0x41] sm:$0xff]
    %v172 = vld [vmem:[%s60 + $0x51] sm:$0xff]
    %v173 = vld [vmem:[%s60 + $0x61] sm:$0xff]
    %v174 = vld [vmem:[%s60 + $0x71] sm:$0xff]
    %v175 = vlaneseq
    %v176 = vshrl.u32 %v175, 7
    %v177 = vsub.s32 4, %v176
    %v178 = vrot.slane %v69, %v177
    %v179 = vmul.f32 %v167, %v178
    %v180 = vmul.f32 %v168, %v178
    %v181 = vmul.f32 %v169, %v178
    %v182 = vmul.f32 %v170, %v178
    %v183 = vmul.f32 %v171, %v178
    %v184 = vmul.f32 %v172, %v178
    %v185 = vmul.f32 %v173, %v178
    %v186 = vmul.f32 %v174, %v178
    %v187 = vadd.f32 %v159, %v179
    %v188 = vadd.f32 %v160, %v180
    %v189 = vadd.f32 %v161, %v181
    %v190 = vadd.f32 %v162, %v182
    %v191 = vadd.f32 %v163, %v183
    %v192 = vadd.f32 %v164, %v184
    %v193 = vadd.f32 %v165, %v185
    %v194 = vadd.f32 %v166, %v186
    %v195 = vld [vmem:[%s60 + $0x2] sm:$0xff]
    %v196 = vld [vmem:[%s60 + $0x12] sm:$0xff]
    %v197 = vld [vmem:[%s60 + $0x22] sm:$0xff]
    %v198 = vld [vmem:[%s60 + $0x32] sm:$0xff]
    %v199 = vld [vmem:[%s60 + $0x42] sm:$0xff]
    %v200 = vld [vmem:[%s60 + $0x52] sm:$0xff]
    %v201 = vld [vmem:[%s60 + $0x62] sm:$0xff]
    %v202 = vld [vmem:[%s60 + $0x72] sm:$0xff]
    %v203 = vlaneseq
    %v204 = vshrl.u32 %v203, 7
    %v205 = vsub.s32 5, %v204
    %v206 = vrot.slane %v69, %v205
    %v207 = vmul.f32 %v195, %v206
    %v208 = vmul.f32 %v196, %v206
    %v209 = vmul.f32 %v197, %v206
    %v210 = vmul.f32 %v198, %v206
    %v211 = vmul.f32 %v199, %v206
    %v212 = vmul.f32 %v200, %v206
    %v213 = vmul.f32 %v201, %v206
    %v214 = vmul.f32 %v202, %v206
    %v215 = vadd.f32 %v187, %v207
    %v216 = vadd.f32 %v188, %v208
    %v217 = vadd.f32 %v189, %v209
    %v218 = vadd.f32 %v190, %v210
    %v219 = vadd.f32 %v191, %v211
    %v220 = vadd.f32 %v192, %v212
    %v221 = vadd.f32 %v193, %v213
    %v222 = vadd.f32 %v194, %v214
    %s223 = scalar_lea.vmem [#allocation2], 32
    %v224 = vld [vmem:[%s223] sm:$0xff]
    %v225 = vld [vmem:[%s223 + $0x10] sm:$0xff]
    %v226 = vld [vmem:[%s223 + $0x20] sm:$0xff]
    %v227 = vld [vmem:[%s223 + $0x30] sm:$0xff]
    %v228 = vld [vmem:[%s223 + $0x40] sm:$0xff]
    %v229 = vld [vmem:[%s223 + $0x50] sm:$0xff]
    %v230 = vld [vmem:[%s223 + $0x60] sm:$0xff]
    %v231 = vld [vmem:[%s223 + $0x70] sm:$0xff]
    %v232 = vlaneseq
    %v233 = vshrl.u32 %v232, 7
    %v234 = vsub.s32 6, %v233
    %v235 = vrot.slane %v69, %v234
    %v236 = vmul.f32 %v224, %v235
    %v237 = vmul.f32 %v225, %v235
    %v238 = vmul.f32 %v226, %v235
    %v239 = vmul.f32 %v227, %v235
    %v240 = vmul.f32 %v228, %v235
    %v241 = vmul.f32 %v229, %v235
    %v242 = vmul.f32 %v230, %v235
    %v243 = vmul.f32 %v231, %v235
    %v244 = vld [vmem:[%s223 + $0x1] sm:$0xff]
    %v245 = vld [vmem:[%s223 + $0x11] sm:$0xff]
    %v246 = vld [vmem:[%s223 + $0x21] sm:$0xff]
    %v247 = vld [vmem:[%s223 + $0x31] sm:$0xff]
    %v248 = vld [vmem:[%s223 + $0x41] sm:$0xff]
    %v249 = vld [vmem:[%s223 + $0x51] sm:$0xff]
    %v250 = vld [vmem:[%s223 + $0x61] sm:$0xff]
    %v251 = vld [vmem:[%s223 + $0x71] sm:$0xff]
    %v252 = vlaneseq
    %v253 = vshrl.u32 %v252, 7
    %v254 = vsub.s32 7, %v253
    %v255 = vrot.slane %v69, %v254
    %v256 = vmul.f32 %v244, %v255
    %v257 = vmul.f32 %v245, %v255
    %v258 = vmul.f32 %v246, %v255
    %v259 = vmul.f32 %v247, %v255
    %v260 = vmul.f32 %v248, %v255
    %v261 = vmul.f32 %v249, %v255
    %v262 = vmul.f32 %v250, %v255
    %v263 = vmul.f32 %v251, %v255
    %v264 = vadd.f32 %v236, %v256
    %v265 = vadd.f32 %v237, %v257
    %v266 = vadd.f32 %v238, %v258
    %v267 = vadd.f32 %v239, %v259
    %v268 = vadd.f32 %v240, %v260
    %v269 = vadd.f32 %v241, %v261
    %v270 = vadd.f32 %v242, %v262
    %v271 = vadd.f32 %v243, %v263
    %v272 = vld [vmem:[%s223 + $0x2] sm:$0xff]
    %v273 = vld [vmem:[%s223 + $0x12] sm:$0xff]
    %v274 = vld [vmem:[%s223 + $0x22] sm:$0xff]
    %v275 = vld [vmem:[%s223 + $0x32] sm:$0xff]
    %v276 = vld [vmem:[%s223 + $0x42] sm:$0xff]
    %v277 = vld [vmem:[%s223 + $0x52] sm:$0xff]
    %v278 = vld [vmem:[%s223 + $0x62] sm:$0xff]
    %v279 = vld [vmem:[%s223 + $0x72] sm:$0xff]
    %v280 = vlaneseq
    %v281 = vshrl.u32 %v280, 7
    %v282 = vsub.s32 0, %v281
    %v283 = vrot.slane %v70, %v282
    %v284 = vmul.f32 %v272, %v283
    %v285 = vmul.f32 %v273, %v283
    %v286 = vmul.f32 %v274, %v283
    %v287 = vmul.f32 %v275, %v283
    %v288 = vmul.f32 %v276, %v283
    %v289 = vmul.f32 %v277, %v283
    %v290 = vmul.f32 %v278, %v283
    %v291 = vmul.f32 %v279, %v283
    %v292 = vadd.f32 %v264, %v284
    %v293 = vadd.f32 %v265, %v285
    %v294 = vadd.f32 %v266, %v286
    %v295 = vadd.f32 %v267, %v287
    %v296 = vadd.f32 %v268, %v288
    %v297 = vadd.f32 %v269, %v289
    %v298 = vadd.f32 %v270, %v290
    %v299 = vadd.f32 %v271, %v291
    %v300 = vadd.f32 %v139, %v215
    %v301 = vadd.f32 %v140, %v216
    %v302 = vadd.f32 %v141, %v217
    %v303 = vadd.f32 %v142, %v218
    %v304 = vadd.f32 %v143, %v219
    %v305 = vadd.f32 %v144, %v220
    %v306 = vadd.f32 %v145, %v221
    %v307 = vadd.f32 %v146, %v222
    %v308 = vld [vmem:[%s2] sm:$0x1]
    %v310 = vlaneseq
    %v311 = vshrl.u32 %v310, 7
    %v312 = vsub.s32 0, %v311
    %v313 = vrot.slane %v308, %v312
    %v315 = vadd.f32 %v292, %v313
    %v316 = vadd.f32 %v293, %v313
    %v317 = vadd.f32 %v294, %v313
    %v318 = vadd.f32 %v295, %v313
    %v319 = vadd.f32 %v296, %v313
    %v320 = vadd.f32 %v297, %v313
    %v321 = vadd.f32 %v298, %v313
    %v322 = vadd.f32 %v299, %v313
    %v323 = vadd.f32 %v300, %v315
    %v324 = vadd.f32 %v301, %v316
    %v325 = vadd.f32 %v302, %v317
    %v326 = vadd.f32 %v303, %v318
    %v327 = vadd.f32 %v304, %v319
    %v328 = vadd.f32 %v305, %v320
    %v329 = vadd.f32 %v306, %v321
    %v330 = vadd.f32 %v307, %v322
    %331 = vst [vmem:[#allocation3] sm:$0xff] %v323
    %332 = vst [vmem:[#allocation3 + $0x8] sm:$0xff] %v324
    %333 = vst [vmem:[#allocation3 + $0x10] sm:$0xff] %v325
    %334 = vst [vmem:[#allocation3 + $0x18] sm:$0xff] %v326
    %335 = vst [vmem:[#allocation3 + $0x20] sm:$0xff] %v327
    %336 = vst [vmem:[#allocation3 + $0x28] sm:$0xff] %v328
    %337 = vst [vmem:[#allocation3 + $0x30] sm:$0xff] %v329
    %338 = vst [vmem:[#allocation3 + $0x38] sm:$0xff] %v330
    %v339 = vld [vmem:[#allocation3] sm:$0xff]
    %v340 = vld [vmem:[#allocation3 + $0x8] sm:$0xff]
    %v341 = vld [vmem:[#allocation3 + $0x10] sm:$0xff]
    %v342 = vld [vmem:[#allocation3 + $0x18] sm:$0xff]
    %v343 = vld [vmem:[#allocation3 + $0x20] sm:$0xff]
    %v344 = vld [vmem:[#allocation3 + $0x28] sm:$0xff]
    %v345 = vld [vmem:[#allocation3 + $0x30] sm:$0xff]
    %v346 = vld [vmem:[#allocation3 + $0x38] sm:$0xff]
    %v347 = vadd.f32 %v339, %v340
    %v348 = vadd.f32 %v347, %v341
    %v349 = vadd.f32 %v348, %v342
    %v350 = vadd.f32 %v349, %v343
    %v351 = vadd.f32 %v350, %v344
    %v352 = vadd.f32 %v351, %v345
    %v353 = vadd.f32 %v352, %v346
    %v354 = vrot.slane %v353, 4
    %v355 = vadd.f32 %v353, %v354
    %v356 = vrot.slane %v355, 2
    %v357 = vadd.f32 %v355, %v356
    %v358 = vrot.slane %v357, 1
    %v359 = vadd.f32 %v357, %v358
    %v360 = vmul.f32 %v339, %v339
    %v361 = vmul.f32 %v340, %v340
    %v362 = vmul.f32 %v341, %v341
    %v363 = vmul.f32 %v342, %v342
    %v364 = vmul.f32 %v343, %v343
    %v365 = vmul.f32 %v344, %v344
    %v366 = vmul.f32 %v345, %v345
    %v367 = vmul.f32 %v346, %v346
    %v368 = vadd.f32 %v360, %v361
    %v369 = vadd.f32 %v368, %v362
    %v370 = vadd.f32 %v369, %v363
    %v371 = vadd.f32 %v370, %v364
    %v372 = vadd.f32 %v371, %v365
    %v373 = vadd.f32 %v372, %v366
    %v374 = vadd.f32 %v373, %v367
    %v375 = vrot.slane %v374, 4
    %v376 = vadd.f32 %v374, %v375
    %v377 = vrot.slane %v376, 2
    %v378 = vadd.f32 %v376, %v377
    %v379 = vrot.slane %v378, 1
    %v380 = vadd.f32 %v378, %v379
    %v381 = vld [vmem:[%s5] sm:$0xff]
    %v382 = vld [vmem:[%s5 + $0x8] sm:$0xff]
    %v383 = vld [vmem:[%s5 + $0x10] sm:$0xff]
    %v384 = vld [vmem:[%s5 + $0x18] sm:$0xff]
    %v385 = vld [vmem:[%s5 + $0x20] sm:$0xff]
    %v386 = vld [vmem:[%s5 + $0x28] sm:$0xff]
    %v387 = vld [vmem:[%s5 + $0x30] sm:$0xff]
    %v388 = vld [vmem:[%s5 + $0x38] sm:$0xff]
    %v389 = vld [vmem:[%s5 + $0x40] sm:$0xff]
    %v390 = vld [vmem:[%s5 + $0x48] sm:$0xff]
    %v391 = vld [vmem:[%s5 + $0x50] sm:$0xff]
    %v392 = vld [vmem:[%s5 + $0x58] sm:$0xff]
    %v393 = vld [vmem:[%s5 + $0x60] sm:$0xff]
    %v394 = vld [vmem:[%s5 + $0x68] sm:$0xff]
    %v395 = vld [vmem:[%s5 + $0x70] sm:$0xff]
    %v396 = vld [vmem:[%s5 + $0x78] sm:$0xff]
    %v397 = vpack.c.bf16 %v359, %v359
    %v398 = vunpack.c.l.bf16 %v397
    %v399 = vsub.f32 %v359, %v398
    %400 = vmatprep.subr.mxu0 0.0
    %401 = vmatpush1.msra.mxu0 %v396
    %402 = vmatprep.subr.mxu0 0.0
    %403 = vmatpush1.msra.mxu0 %v395
    %404 = vmatprep.subr.mxu0 0.0
    %405 = vmatpush1.msra.mxu0 %v394
    %406 = vmatprep.subr.mxu0 0.0
    %407 = vmatpush1.msra.mxu0 %v393
    %408 = vmatprep.subr.mxu0 0.0
    %409 = vmatpush1.msra.mxu0 %v392
    %410 = vmatprep.subr.mxu0 0.0
    %411 = vmatpush1.msra.mxu0 %v391
    %412 = vmatprep.subr.mxu0 0.0
    %413 = vmatpush1.msra.mxu0 %v390
    %414 = vmatprep.subr.mxu0 0.0
    %415 = vmatpush1.msra.mxu0 %v389
    %416 = vmatprep.subr.mxu0 0.0
    %417 = vmatpush1.msra.mxu0 %v388
    %418 = vmatprep.subr.mxu0 0.0
    %419 = vmatpush1.msra.mxu0 %v387
    %420 = vmatprep.subr.mxu0 0.0
    %421 = vmatpush1.msra.mxu0 %v386
    %422 = vmatprep.subr.mxu0 0.0
    %423 = vmatpush1.msra.mxu0 %v385
    %424 = vmatprep.subr.mxu0 0.0
    %425 = vmatpush1.msra.mxu0 %v384
    %426 = vmatprep.subr.mxu0 0.0
    %427 = vmatpush1.msra.mxu0 %v383
    %428 = vmatprep.subr.mxu0 0.0
    %429 = vmatpush1.msra.mxu0 %v382
    %430 = vmatprep.subr.mxu0 0.0
    %431 = vmatpush1.msra.mxu0 %v381
    %432 = vmatprep.subr.mxu0 0.0
    %433 = vmatpush2.msra.mxu0 0.0
    %434 = vmatprep.subr.mxu0 0.0
    %435 = vmatpush2.msra.mxu0 0.0
    %436 = vmatprep.subr.mxu0 0.0
    %437 = vmatpush2.msra.mxu0 0.0
    %438 = vmatprep.subr.mxu0 0.0
    %439 = vmatpush2.msra.mxu0 0.0
    %440 = vmatprep.subr.mxu0 0.0
    %441 = vmatpush2.msra.mxu0 0.0
    %442 = vmatprep.subr.mxu0 0.0
    %443 = vmatpush2.msra.mxu0 0.0
    %444 = vmatprep.subr.mxu0 0.0
    %445 = vmatpush2.msra.mxu0 0.0
    %446 = vmatprep.subr.mxu0 0.0
    %447 = vmatpush2.msra.mxu0 0.0
    %448 = vmatprep.subr.mxu0 0.0
    %449 = vmatpush2.msra.mxu0 0.0
    %450 = vmatprep.subr.mxu0 0.0
    %451 = vmatpush2.msra.mxu0 0.0
    %452 = vmatprep.subr.mxu0 0.0
    %453 = vmatpush2.msra.mxu0 0.0
    %454 = vmatprep.subr.mxu0 0.0
    %455 = vmatpush2.msra.mxu0 0.0
    %456 = vmatprep.subr.mxu0 0.0
    %457 = vmatpush2.msra.mxu0 0.0
    %458 = vmatprep.subr.mxu0 0.0
    %459 = vmatpush2.msra.mxu0 0.0
    %460 = vmatprep.subr.mxu0 0.0
    %461 = vmatpush2.msra.mxu0 0.0
    %462 = vmatprep.subr.mxu0 0.0
    %463 = vmatpush2.msra.mxu0 0.0
    %464 = vmatprep.mubr.f32.mxu0 0.0
    %465 = vmatmul.mubr.f32.gmra.mxu0 %v399
    %v466 = vpop.f32.mrf.mxu0
    %v467 = vadd.f32 0.0, %v466
    %v468 = vpop.f32.mrf.mxu0
    %469 = vdwg.mxu0
    %470 = vmatprep.subr.mxu0 0.0
    %471 = vmatpush1.msra.mxu0 %v396
    %472 = vmatprep.subr.mxu0 0.0
    %473 = vmatpush1.msra.mxu0 %v395
    %474 = vmatprep.subr.mxu0 0.0
    %475 = vmatpush1.msra.mxu0 %v394
    %476 = vmatprep.subr.mxu0 0.0
    %477 = vmatpush1.msra.mxu0 %v393
    %478 = vmatprep.subr.mxu0 0.0
    %479 = vmatpush1.msra.mxu0 %v392
    %480 = vmatprep.subr.mxu0 0.0
    %481 = vmatpush1.msra.mxu0 %v391
    %482 = vmatprep.subr.mxu0 0.0
    %483 = vmatpush1.msra.mxu0 %v390
    %484 = vmatprep.subr.mxu0 0.0
    %485 = vmatpush1.msra.mxu0 %v389
    %486 = vmatprep.subr.mxu0 0.0
    %487 = vmatpush1.msra.mxu0 %v388
    %488 = vmatprep.subr.mxu0 0.0
    %489 = vmatpush1.msra.mxu0 %v387
    %490 = vmatprep.subr.mxu0 0.0
    %491 = vmatpush1.msra.mxu0 %v386
    %492 = vmatprep.subr.mxu0 0.0
    %493 = vmatpush1.msra.mxu0 %v385
    %494 = vmatprep.subr.mxu0 0.0
    %495 = vmatpush1.msra.mxu0 %v384
    %496 = vmatprep.subr.mxu0 0.0
    %497 = vmatpush1.msra.mxu0 %v383
    %498 = vmatprep.subr.mxu0 0.0
    %499 = vmatpush1.msra.mxu0 %v382
    %500 = vmatprep.subr.mxu0 0.0
    %501 = vmatpush1.msra.mxu0 %v381
    %502 = vmatprep.subr.mxu0 0.0
    %503 = vmatpush2.msra.mxu0 0.0
    %504 = vmatprep.subr.mxu0 0.0
    %505 = vmatpush2.msra.mxu0 0.0
    %506 = vmatprep.subr.mxu0 0.0
    %507 = vmatpush2.msra.mxu0 0.0
    %508 = vmatprep.subr.mxu0 0.0
    %509 = vmatpush2.msra.mxu0 0.0
    %510 = vmatprep.subr.mxu0 0.0
    %511 = vmatpush2.msra.mxu0 0.0
    %512 = vmatprep.subr.mxu0 0.0
    %513 = vmatpush2.msra.mxu0 0.0
    %514 = vmatprep.subr.mxu0 0.0
    %515 = vmatpush2.msra.mxu0 0.0
    %516 = vmatprep.subr.mxu0 0.0
    %517 = vmatpush2.msra.mxu0 0.0
    %518 = vmatprep.subr.mxu0 0.0
    %519 = vmatpush2.msra.mxu0 0.0
    %520 = vmatprep.subr.mxu0 0.0
    %521 = vmatpush2.msra.mxu0 0.0
    %522 = vmatprep.subr.mxu0 0.0
    %523 = vmatpush2.msra.mxu0 0.0
    %524 = vmatprep.subr.mxu0 0.0
    %525 = vmatpush2.msra.mxu0 0.0
    %526 = vmatprep.subr.mxu0 0.0
    %527 = vmatpush2.msra.mxu0 0.0
    %528 = vmatprep.subr.mxu0 0.0
    %529 = vmatpush2.msra.mxu0 0.0
    %530 = vmatprep.subr.mxu0 0.0
    %531 = vmatpush2.msra.mxu0 0.0
    %532 = vmatprep.subr.mxu0 0.0
    %533 = vmatpush2.msra.mxu0 0.0
    %534 = vmatprep.mubr.f32.mxu0 0.0
    %535 = vmatmul.mubr.f32.gmra.mxu0 %v398
    %v536 = vpop.f32.mrf.mxu0
    %v537 = vadd.f32 %v467, %v536
    %v538 = vpop.f32.mrf.mxu0
    %539 = vdwg.mxu0
    %v540 = vpack.c.bf16 %v380, %v380
    %v541 = vunpack.c.l.bf16 %v540
    %v542 = vsub.f32 %v380, %v541
    %543 = vmatprep.subr.mxu0 0.0
    %544 = vmatpush1.msra.mxu0 %v396
    %545 = vmatprep.subr.mxu0 0.0
    %546 = vmatpush1.msra.mxu0 %v395
    %547 = vmatprep.subr.mxu0 0.0
    %548 = vmatpush1.msra.mxu0 %v394
    %549 = vmatprep.subr.mxu0 0.0
    %550 = vmatpush1.msra.mxu0 %v393
    %551 = vmatprep.subr.mxu0 0.0
    %552 = vmatpush1.msra.mxu0 %v392
    %553 = vmatprep.subr.mxu0 0.0
    %554 = vmatpush1.msra.mxu0 %v391
    %555 = vmatprep.subr.mxu0 0.0
    %556 = vmatpush1.msra.mxu0 %v390
    %557 = vmatprep.subr.mxu0 0.0
    %558 = vmatpush1.msra.mxu0 %v389
    %559 = vmatprep.subr.mxu0 0.0
    %560 = vmatpush1.msra.mxu0 %v388
    %561 = vmatprep.subr.mxu0 0.0
    %562 = vmatpush1.msra.mxu0 %v387
    %563 = vmatprep.subr.mxu0 0.0
    %564 = vmatpush1.msra.mxu0 %v386
    %565 = vmatprep.subr.mxu0 0.0
    %566 = vmatpush1.msra.mxu0 %v385
    %567 = vmatprep.subr.mxu0 0.0
    %568 = vmatpush1.msra.mxu0 %v384
    %569 = vmatprep.subr.mxu0 0.0
    %570 = vmatpush1.msra.mxu0 %v383
    %571 = vmatprep.subr.mxu0 0.0
    %572 = vmatpush1.msra.mxu0 %v382
    %573 = vmatprep.subr.mxu0 0.0
    %574 = vmatpush1.msra.mxu0 %v381
    %575 = vmatprep.subr.mxu0 0.0
    %576 = vmatpush2.msra.mxu0 0.0
    %577 = vmatprep.subr.mxu0 0.0
    %578 = vmatpush2.msra.mxu0 0.0
    %579 = vmatprep.subr.mxu0 0.0
    %580 = vmatpush2.msra.mxu0 0.0
    %581 = vmatprep.subr.mxu0 0.0
    %582 = vmatpush2.msra.mxu0 0.0
    %583 = vmatprep.subr.mxu0 0.0
    %584 = vmatpush2.msra.mxu0 0.0
    %585 = vmatprep.subr.mxu0 0.0
    %586 = vmatpush2.msra.mxu0 0.0
    %587 = vmatprep.subr.mxu0 0.0
    %588 = vmatpush2.msra.mxu0 0.0
    %589 = vmatprep.subr.mxu0 0.0
    %590 = vmatpush2.msra.mxu0 0.0
    %591 = vmatprep.subr.mxu0 0.0
    %592 = vmatpush2.msra.mxu0 0.0
    %593 = vmatprep.subr.mxu0 0.0
    %594 = vmatpush2.msra.mxu0 0.0
    %595 = vmatprep.subr.mxu0 0.0
    %596 = vmatpush2.msra.mxu0 0.0
    %597 = vmatprep.subr.mxu0 0.0
    %598 = vmatpush2.msra.mxu0 0.0
    %599 = vmatprep.subr.mxu0 0.0
    %600 = vmatpush2.msra.mxu0 0.0
    %601 = vmatprep.subr.mxu0 0.0
    %602 = vmatpush2.msra.mxu0 0.0
    %603 = vmatprep.subr.mxu0 0.0
    %604 = vmatpush2.msra.mxu0 0.0
    %605 = vmatprep.subr.mxu0 0.0
    %606 = vmatpush2.msra.mxu0 0.0
    %607 = vmatprep.mubr.f32.mxu0 0.0
    %608 = vmatmul.mubr.f32.gmra.mxu0 %v542
    %v609 = vpop.f32.mrf.mxu0
    %v610 = vadd.f32 0.0, %v609
    %v611 = vpop.f32.mrf.mxu0
    %612 = vdwg.mxu0
    %613 = vmatprep.subr.mxu0 0.0
    %614 = vmatpush1.msra.mxu0 %v396
    %615 = vmatprep.subr.mxu0 0.0
    %616 = vmatpush1.msra.mxu0 %v395
    %617 = vmatprep.subr.mxu0 0.0
    %618 = vmatpush1.msra.mxu0 %v394
    %619 = vmatprep.subr.mxu0 0.0
    %620 = vmatpush1.msra.mxu0 %v393
    %621 = vmatprep.subr.mxu0 0.0
    %622 = vmatpush1.msra.mxu0 %v392
    %623 = vmatprep.subr.mxu0 0.0
    %624 = vmatpush1.msra.mxu0 %v391
    %625 = vmatprep.subr.mxu0 0.0
    %626 = vmatpush1.msra.mxu0 %v390
    %627 = vmatprep.subr.mxu0 0.0
    %628 = vmatpush1.msra.mxu0 %v389
    %629 = vmatprep.subr.mxu0 0.0
    %630 = vmatpush1.msra.mxu0 %v388
    %631 = vmatprep.subr.mxu0 0.0
    %632 = vmatpush1.msra.mxu0 %v387
    %633 = vmatprep.subr.mxu0 0.0
    %634 = vmatpush1.msra.mxu0 %v386
    %635 = vmatprep.subr.mxu0 0.0
    %636 = vmatpush1.msra.mxu0 %v385
    %637 = vmatprep.subr.mxu0 0.0
    %638 = vmatpush1.msra.mxu0 %v384
    %639 = vmatprep.subr.mxu0 0.0
    %640 = vmatpush1.msra.mxu0 %v383
    %641 = vmatprep.subr.mxu0 0.0
    %642 = vmatpush1.msra.mxu0 %v382
    %643 = vmatprep.subr.mxu0 0.0
    %644 = vmatpush1.msra.mxu0 %v381
    %645 = vmatprep.subr.mxu0 0.0
    %646 = vmatpush2.msra.mxu0 0.0
    %647 = vmatprep.subr.mxu0 0.0
    %648 = vmatpush2.msra.mxu0 0.0
    %649 = vmatprep.subr.mxu0 0.0
    %650 = vmatpush2.msra.mxu0 0.0
    %651 = vmatprep.subr.mxu0 0.0
    %652 = vmatpush2.msra.mxu0 0.0
    %653 = vmatprep.subr.mxu0 0.0
    %654 = vmatpush2.msra.mxu0 0.0
    %655 = vmatprep.subr.mxu0 0.0
    %656 = vmatpush2.msra.mxu0 0.0
    %657 = vmatprep.subr.mxu0 0.0
    %658 = vmatpush2.msra.mxu0 0.0
    %659 = vmatprep.subr.mxu0 0.0
    %660 = vmatpush2.msra.mxu0 0.0
    %661 = vmatprep.subr.mxu0 0.0
    %662 = vmatpush2.msra.mxu0 0.0
    %663 = vmatprep.subr.mxu0 0.0
    %664 = vmatpush2.msra.mxu0 0.0
    %665 = vmatprep.subr.mxu0 0.0
    %666 = vmatpush2.msra.mxu0 0.0
    %667 = vmatprep.subr.mxu0 0.0
    %668 = vmatpush2.msra.mxu0 0.0
    %669 = vmatprep.subr.mxu0 0.0
    %670 = vmatpush2.msra.mxu0 0.0
    %671 = vmatprep.subr.mxu0 0.0
    %672 = vmatpush2.msra.mxu0 0.0
    %673 = vmatprep.subr.mxu0 0.0
    %674 = vmatpush2.msra.mxu0 0.0
    %675 = vmatprep.subr.mxu0 0.0
    %676 = vmatpush2.msra.mxu0 0.0
    %677 = vmatprep.mubr.f32.mxu0 0.0
    %678 = vmatmul.mubr.f32.gmra.mxu0 %v541
    %v679 = vpop.f32.mrf.mxu0
    %v680 = vadd.f32 %v610, %v679
    %v681 = vpop.f32.mrf.mxu0
    %682 = vdwg.mxu0
    %v683 = vmul.f32 %v537, 0.0078125
    %v684 = vmul.f32 %v680, 0.0078125
    %v685 = vmul.f32 %v683, %v683
    %v686 = vsub.f32 %v684, %v685
    %v687 = vmax.f32 %v686, 0.0
    %v688 = vadd.f32 %v687, 1e-05
    %v689 = vrsqrt.pop %v688
    %v690 = vld [vmem:[%s6] sm:$0xff]
    %v691 = vld [vmem:[%s6 + $0x8] sm:$0xff]
    %v692 = vld [vmem:[%s6 + $0x10] sm:$0xff]
    %v693 = vld [vmem:[%s6 + $0x18] sm:$0xff]
    %v694 = vld [vmem:[%s6 + $0x20] sm:$0xff]
    %v695 = vld [vmem:[%s6 + $0x28] sm:$0xff]
    %v696 = vld [vmem:[%s6 + $0x30] sm:$0xff]
    %v697 = vld [vmem:[%s6 + $0x38] sm:$0xff]
    %v698 = vpack.c.bf16 %v683, %v683
    %v699 = vunpack.c.l.bf16 %v698
    %v700 = vsub.f32 %v683, %v699
    %vm701 = vcmask 523264
    %v703 = vsel %vm701, %v700, 0
    %705 = vmatprep.subr.mxu0 0.0
    %706 = vmatpush1.msra.mxu0 0.0
    %707 = vmatprep.subr.mxu0 0.0
    %708 = vmatpush1.msra.mxu0 0.0
    %709 = vmatprep.subr.mxu0 0.0
    %710 = vmatpush1.msra.mxu0 0.0
    %711 = vmatprep.subr.mxu0 0.0
    %712 = vmatpush1.msra.mxu0 0.0
    %713 = vmatprep.subr.mxu0 0.0
    %714 = vmatpush1.msra.mxu0 0.0
    %715 = vmatprep.subr.mxu0 0.0
    %716 = vmatpush1.msra.mxu0 0.0
    %717 = vmatprep.subr.mxu0 0.0
    %718 = vmatpush1.msra.mxu0 0.0
    %719 = vmatprep.subr.mxu0 0.0
    %720 = vmatpush1.msra.mxu0 0.0
    %721 = vmatprep.subr.mxu0 0.0
    %722 = vmatpush1.msra.mxu0 %v697
    %723 = vmatprep.subr.mxu0 0.0
    %724 = vmatpush1.msra.mxu0 %v696
    %725 = vmatprep.subr.mxu0 0.0
    %726 = vmatpush1.msra.mxu0 %v695
    %727 = vmatprep.subr.mxu0 0.0
    %728 = vmatpush1.msra.mxu0 %v694
    %729 = vmatprep.subr.mxu0 0.0
    %730 = vmatpush1.msra.mxu0 %v693
    %731 = vmatprep.subr.mxu0 0.0
    %732 = vmatpush1.msra.mxu0 %v692
    %733 = vmatprep.subr.mxu0 0.0
    %734 = vmatpush1.msra.mxu0 %v691
    %735 = vmatprep.subr.mxu0 0.0
    %736 = vmatpush1.msra.mxu0 %v690
    %737 = vmatprep.subr.mxu0 0.0
    %738 = vmatpush2.msra.mxu0 0.0
    %739 = vmatprep.subr.mxu0 0.0
    %740 = vmatpush2.msra.mxu0 0.0
    %741 = vmatprep.subr.mxu0 0.0
    %742 = vmatpush2.msra.mxu0 0.0
    %743 = vmatprep.subr.mxu0 0.0
    %744 = vmatpush2.msra.mxu0 0.0
    %745 = vmatprep.subr.mxu0 0.0
    %746 = vmatpush2.msra.mxu0 0.0
    %747 = vmatprep.subr.mxu0 0.0
    %748 = vmatpush2.msra.mxu0 0.0
    %749 = vmatprep.subr.mxu0 0.0
    %750 = vmatpush2.msra.mxu0 0.0
    %751 = vmatprep.subr.mxu0 0.0
    %752 = vmatpush2.msra.mxu0 0.0
    %753 = vmatprep.subr.mxu0 0.0
    %754 = vmatpush2.msra.mxu0 0.0
    %755 = vmatprep.subr.mxu0 0.0
    %756 = vmatpush2.msra.mxu0 0.0
    %757 = vmatprep.subr.mxu0 0.0
    %758 = vmatpush2.msra.mxu0 0.0
    %759 = vmatprep.subr.mxu0 0.0
    %760 = vmatpush2.msra.mxu0 0.0
    %761 = vmatprep.subr.mxu0 0.0
    %762 = vmatpush2.msra.mxu0 0.0
    %763 = vmatprep.subr.mxu0 0.0
    %764 = vmatpush2.msra.mxu0 0.0
    %765 = vmatprep.subr.mxu0 0.0
    %766 = vmatpush2.msra.mxu0 0.0
    %767 = vmatprep.subr.mxu0 0.0
    %768 = vmatpush2.msra.mxu0 0.0
    %769 = vmatprep.mubr.f32.mxu0 0.0
    %770 = vmatmul.mubr.f32.gmra.mxu0 %v703
    %v771 = vpop.f32.mrf.mxu0
    %v772 = vadd.f32 0.0, %v771
    %v773 = vpop.f32.mrf.mxu0
    %774 = vdwg.mxu0
    %v776 = vsel %vm701, %v699, 0
    %778 = vmatprep.subr.mxu0 0.0
    %779 = vmatpush1.msra.mxu0 0.0
    %780 = vmatprep.subr.mxu0 0.0
    %781 = vmatpush1.msra.mxu0 0.0
    %782 = vmatprep.subr.mxu0 0.0
    %783 = vmatpush1.msra.mxu0 0.0
    %784 = vmatprep.subr.mxu0 0.0
    %785 = vmatpush1.msra.mxu0 0.0
    %786 = vmatprep.subr.mxu0 0.0
    %787 = vmatpush1.msra.mxu0 0.0
    %788 = vmatprep.subr.mxu0 0.0
    %789 = vmatpush1.msra.mxu0 0.0
    %790 = vmatprep.subr.mxu0 0.0
    %791 = vmatpush1.msra.mxu0 0.0
    %792 = vmatprep.subr.mxu0 0.0
    %793 = vmatpush1.msra.mxu0 0.0
    %794 = vmatprep.subr.mxu0 0.0
    %795 = vmatpush1.msra.mxu0 %v697
    %796 = vmatprep.subr.mxu0 0.0
    %797 = vmatpush1.msra.mxu0 %v696
    %798 = vmatprep.subr.mxu0 0.0
    %799 = vmatpush1.msra.mxu0 %v695
    %800 = vmatprep.subr.mxu0 0.0
    %801 = vmatpush1.msra.mxu0 %v694
    %802 = vmatprep.subr.mxu0 0.0
    %803 = vmatpush1.msra.mxu0 %v693
    %804 = vmatprep.subr.mxu0 0.0
    %805 = vmatpush1.msra.mxu0 %v692
    %806 = vmatprep.subr.mxu0 0.0
    %807 = vmatpush1.msra.mxu0 %v691
    %808 = vmatprep.subr.mxu0 0.0
    %809 = vmatpush1.msra.mxu0 %v690
    %810 = vmatprep.subr.mxu0 0.0
    %811 = vmatpush2.msra.mxu0 0.0
    %812 = vmatprep.subr.mxu0 0.0
    %813 = vmatpush2.msra.mxu0 0.0
    %814 = vmatprep.subr.mxu0 0.0
    %815 = vmatpush2.msra.mxu0 0.0
    %816 = vmatprep.subr.mxu0 0.0
    %817 = vmatpush2.msra.mxu0 0.0
    %818 = vmatprep.subr.mxu0 0.0
    %819 = vmatpush2.msra.mxu0 0.0
    %820 = vmatprep.subr.mxu0 0.0
    %821 = vmatpush2.msra.mxu0 0.0
    %822 = vmatprep.subr.mxu0 0.0
    %823 = vmatpush2.msra.mxu0 0.0
    %824 = vmatprep.subr.mxu0 0.0
    %825 = vmatpush2.msra.mxu0 0.0
    %826 = vmatprep.subr.mxu0 0.0
    %827 = vmatpush2.msra.mxu0 0.0
    %828 = vmatprep.subr.mxu0 0.0
    %829 = vmatpush2.msra.mxu0 0.0
    %830 = vmatprep.subr.mxu0 0.0
    %831 = vmatpush2.msra.mxu0 0.0
    %832 = vmatprep.subr.mxu0 0.0
    %833 = vmatpush2.msra.mxu0 0.0
    %834 = vmatprep.subr.mxu0 0.0
    %835 = vmatpush2.msra.mxu0 0.0
    %836 = vmatprep.subr.mxu0 0.0
    %837 = vmatpush2.msra.mxu0 0.0
    %838 = vmatprep.subr.mxu0 0.0
    %839 = vmatpush2.msra.mxu0 0.0
    %840 = vmatprep.subr.mxu0 0.0
    %841 = vmatpush2.msra.mxu0 0.0
    %842 = vmatprep.mubr.f32.mxu0 0.0
    %843 = vmatmul.mubr.f32.gmra.mxu0 %v776
    %v844 = vpop.f32.mrf.mxu0
    %v845 = vadd.f32 %v772, %v844
    %v846 = vpop.f32.mrf.mxu0
    %847 = vdwg.mxu0
    %v848 = vpack.c.bf16 %v689, %v689
    %v849 = vunpack.c.l.bf16 %v848
    %v850 = vsub.f32 %v689, %v849
    %v852 = vsel %vm701, %v850, 0
    %854 = vmatprep.subr.mxu0 0.0
    %855 = vmatpush1.msra.mxu0 0.0
    %856 = vmatprep.subr.mxu0 0.0
    %857 = vmatpush1.msra.mxu0 0.0
    %858 = vmatprep.subr.mxu0 0.0
    %859 = vmatpush1.msra.mxu0 0.0
    %860 = vmatprep.subr.mxu0 0.0
    %861 = vmatpush1.msra.mxu0 0.0
    %862 = vmatprep.subr.mxu0 0.0
    %863 = vmatpush1.msra.mxu0 0.0
    %864 = vmatprep.subr.mxu0 0.0
    %865 = vmatpush1.msra.mxu0 0.0
    %866 = vmatprep.subr.mxu0 0.0
    %867 = vmatpush1.msra.mxu0 0.0
    %868 = vmatprep.subr.mxu0 0.0
    %869 = vmatpush1.msra.mxu0 0.0
    %870 = vmatprep.subr.mxu0 0.0
    %871 = vmatpush1.msra.mxu0 %v697
    %872 = vmatprep.subr.mxu0 0.0
    %873 = vmatpush1.msra.mxu0 %v696
    %874 = vmatprep.subr.mxu0 0.0
    %875 = vmatpush1.msra.mxu0 %v695
    %876 = vmatprep.subr.mxu0 0.0
    %877 = vmatpush1.msra.mxu0 %v694
    %878 = vmatprep.subr.mxu0 0.0
    %879 = vmatpush1.msra.mxu0 %v693
    %880 = vmatprep.subr.mxu0 0.0
    %881 = vmatpush1.msra.mxu0 %v692
    %882 = vmatprep.subr.mxu0 0.0
    %883 = vmatpush1.msra.mxu0 %v691
    %884 = vmatprep.subr.mxu0 0.0
    %885 = vmatpush1.msra.mxu0 %v690
    %886 = vmatprep.subr.mxu0 0.0
    %887 = vmatpush2.msra.mxu0 0.0
    %888 = vmatprep.subr.mxu0 0.0
    %889 = vmatpush2.msra.mxu0 0.0
    %890 = vmatprep.subr.mxu0 0.0
    %891 = vmatpush2.msra.mxu0 0.0
    %892 = vmatprep.subr.mxu0 0.0
    %893 = vmatpush2.msra.mxu0 0.0
    %894 = vmatprep.subr.mxu0 0.0
    %895 = vmatpush2.msra.mxu0 0.0
    %896 = vmatprep.subr.mxu0 0.0
    %897 = vmatpush2.msra.mxu0 0.0
    %898 = vmatprep.subr.mxu0 0.0
    %899 = vmatpush2.msra.mxu0 0.0
    %900 = vmatprep.subr.mxu0 0.0
    %901 = vmatpush2.msra.mxu0 0.0
    %902 = vmatprep.subr.mxu0 0.0
    %903 = vmatpush2.msra.mxu0 0.0
    %904 = vmatprep.subr.mxu0 0.0
    %905 = vmatpush2.msra.mxu0 0.0
    %906 = vmatprep.subr.mxu0 0.0
    %907 = vmatpush2.msra.mxu0 0.0
    %908 = vmatprep.subr.mxu0 0.0
    %909 = vmatpush2.msra.mxu0 0.0
    %910 = vmatprep.subr.mxu0 0.0
    %911 = vmatpush2.msra.mxu0 0.0
    %912 = vmatprep.subr.mxu0 0.0
    %913 = vmatpush2.msra.mxu0 0.0
    %914 = vmatprep.subr.mxu0 0.0
    %915 = vmatpush2.msra.mxu0 0.0
    %916 = vmatprep.subr.mxu0 0.0
    %917 = vmatpush2.msra.mxu0 0.0
    %918 = vmatprep.mubr.f32.mxu0 0.0
    %919 = vmatmul.mubr.f32.gmra.mxu0 %v852
    %v920 = vpop.f32.mrf.mxu0
    %v921 = vadd.f32 0.0, %v920
    %v922 = vpop.f32.mrf.mxu0
    %923 = vdwg.mxu0
    %v925 = vsel %vm701, %v849, 0
    %927 = vmatprep.subr.mxu0 0.0
    %928 = vmatpush1.msra.mxu0 0.0
    %929 = vmatprep.subr.mxu0 0.0
    %930 = vmatpush1.msra.mxu0 0.0
    %931 = vmatprep.subr.mxu0 0.0
    %932 = vmatpush1.msra.mxu0 0.0
    %933 = vmatprep.subr.mxu0 0.0
    %934 = vmatpush1.msra.mxu0 0.0
    %935 = vmatprep.subr.mxu0 0.0
    %936 = vmatpush1.msra.mxu0 0.0
    %937 = vmatprep.subr.mxu0 0.0
    %938 = vmatpush1.msra.mxu0 0.0
    %939 = vmatprep.subr.mxu0 0.0
    %940 = vmatpush1.msra.mxu0 0.0
    %941 = vmatprep.subr.mxu0 0.0
    %942 = vmatpush1.msra.mxu0 0.0
    %943 = vmatprep.subr.mxu0 0.0
    %944 = vmatpush1.msra.mxu0 %v697
    %945 = vmatprep.subr.mxu0 0.0
    %946 = vmatpush1.msra.mxu0 %v696
    %947 = vmatprep.subr.mxu0 0.0
    %948 = vmatpush1.msra.mxu0 %v695
    %949 = vmatprep.subr.mxu0 0.0
    %950 = vmatpush1.msra.mxu0 %v694
    %951 = vmatprep.subr.mxu0 0.0
    %952 = vmatpush1.msra.mxu0 %v693
    %953 = vmatprep.subr.mxu0 0.0
    %954 = vmatpush1.msra.mxu0 %v692
    %955 = vmatprep.subr.mxu0 0.0
    %956 = vmatpush1.msra.mxu0 %v691
    %957 = vmatprep.subr.mxu0 0.0
    %958 = vmatpush1.msra.mxu0 %v690
    %959 = vmatprep.subr.mxu0 0.0
    %960 = vmatpush2.msra.mxu0 0.0
    %961 = vmatprep.subr.mxu0 0.0
    %962 = vmatpush2.msra.mxu0 0.0
    %963 = vmatprep.subr.mxu0 0.0
    %964 = vmatpush2.msra.mxu0 0.0
    %965 = vmatprep.subr.mxu0 0.0
    %966 = vmatpush2.msra.mxu0 0.0
    %967 = vmatprep.subr.mxu0 0.0
    %968 = vmatpush2.msra.mxu0 0.0
    %969 = vmatprep.subr.mxu0 0.0
    %970 = vmatpush2.msra.mxu0 0.0
    %971 = vmatprep.subr.mxu0 0.0
    %972 = vmatpush2.msra.mxu0 0.0
    %973 = vmatprep.subr.mxu0 0.0
    %974 = vmatpush2.msra.mxu0 0.0
    %975 = vmatprep.subr.mxu0 0.0
    %976 = vmatpush2.msra.mxu0 0.0
    %977 = vmatprep.subr.mxu0 0.0
    %978 = vmatpush2.msra.mxu0 0.0
    %979 = vmatprep.subr.mxu0 0.0
    %980 = vmatpush2.msra.mxu0 0.0
    %981 = vmatprep.subr.mxu0 0.0
    %982 = vmatpush2.msra.mxu0 0.0
    %983 = vmatprep.subr.mxu0 0.0
    %984 = vmatpush2.msra.mxu0 0.0
    %985 = vmatprep.subr.mxu0 0.0
    %986 = vmatpush2.msra.mxu0 0.0
    %987 = vmatprep.subr.mxu0 0.0
    %988 = vmatpush2.msra.mxu0 0.0
    %989 = vmatprep.subr.mxu0 0.0
    %990 = vmatpush2.msra.mxu0 0.0
    %991 = vmatprep.mubr.f32.mxu0 0.0
    %992 = vmatmul.mubr.f32.gmra.mxu0 %v925
    %v993 = vpop.f32.mrf.mxu0
    %v994 = vadd.f32 %v921, %v993
    %v995 = vpop.f32.mrf.mxu0
    %996 = vdwg.mxu0
    %v997 = vld [vmem:[%s3] sm:$0x1]
    %v998 = vmul.f32 %v994, %v997
    %v999 = vld [vmem:[%s4] sm:$0x1]
    %v1000 = vmul.f32 %v845, %v998
    %v1001 = vsub.f32 %v999, %v1000
    %v1002 = vlaneseq
    %v1003 = vshrl.u32 %v1002, 7
    %v1004 = vsub.s32 0, %v1003
    %v1005 = vrot.slane %v998, %v1004
    %v1006 = vmul.f32 %v339, %v1005
    %v1007 = vmul.f32 %v340, %v1005
    %v1008 = vmul.f32 %v341, %v1005
    %v1009 = vmul.f32 %v342, %v1005
    %v1010 = vmul.f32 %v343, %v1005
    %v1011 = vmul.f32 %v344, %v1005
    %v1012 = vmul.f32 %v345, %v1005
    %v1013 = vmul.f32 %v346, %v1005
    %v1015 = vlaneseq
    %v1016 = vshrl.u32 %v1015, 7
    %v1017 = vsub.s32 0, %v1016
    %v1018 = vrot.slane %v1001, %v1017
    %v1020 = vadd.f32 %v1006, %v1018
    %v1021 = vadd.f32 %v1007, %v1018
    %v1022 = vadd.f32 %v1008, %v1018
    %v1023 = vadd.f32 %v1009, %v1018
    %v1024 = vadd.f32 %v1010, %v1018
    %v1025 = vadd.f32 %v1011, %v1018
    %v1026 = vadd.f32 %v1012, %v1018
    %v1027 = vadd.f32 %v1013, %v1018
    %v1028 = vmul.f32 %v1020, 0.5
    %v1029 = vmul.f32 %v1021, 0.5
    %v1030 = vmul.f32 %v1022, 0.5
    %v1031 = vmul.f32 %v1023, 0.5
    %v1032 = vmul.f32 %v1024, 0.5
    %v1033 = vmul.f32 %v1025, 0.5
    %v1034 = vmul.f32 %v1026, 0.5
    %v1035 = vmul.f32 %v1027, 0.5
    %v1036 = vtanh.pop %v1028
    %v1037 = vtanh.pop %v1029
    %v1038 = vtanh.pop %v1030
    %v1039 = vtanh.pop %v1031
    %v1040 = vtanh.pop %v1032
    %v1041 = vtanh.pop %v1033
    %v1042 = vtanh.pop %v1034
    %v1043 = vtanh.pop %v1035
    %v1044 = vadd.f32 %v1036, 1.0
    %v1045 = vadd.f32 %v1037, 1.0
    %v1046 = vadd.f32 %v1038, 1.0
    %v1047 = vadd.f32 %v1039, 1.0
    %v1048 = vadd.f32 %v1040, 1.0
    %v1049 = vadd.f32 %v1041, 1.0
    %v1050 = vadd.f32 %v1042, 1.0
    %v1051 = vadd.f32 %v1043, 1.0
    %v1052 = vmul.f32 %v1044, 0.5
    %v1053 = vmul.f32 %v1045, 0.5
    %v1054 = vmul.f32 %v1046, 0.5
    %v1055 = vmul.f32 %v1047, 0.5
    %v1056 = vmul.f32 %v1048, 0.5
    %v1057 = vmul.f32 %v1049, 0.5
    %v1058 = vmul.f32 %v1050, 0.5
    %v1059 = vmul.f32 %v1051, 0.5
    %v1060 = vmul.f32 %v1020, %v1052
    %v1061 = vmul.f32 %v1021, %v1053
    %v1062 = vmul.f32 %v1022, %v1054
    %v1063 = vmul.f32 %v1023, %v1055
    %v1064 = vmul.f32 %v1024, %v1056
    %v1065 = vmul.f32 %v1025, %v1057
    %v1066 = vmul.f32 %v1026, %v1058
    %v1067 = vmul.f32 %v1027, %v1059
    %1068 = vst [vmem:[#allocation3] sm:$0xff] %v1060
    %1069 = vst [vmem:[#allocation3 + $0x8] sm:$0xff] %v1061
    %1070 = vst [vmem:[#allocation3 + $0x10] sm:$0xff] %v1062
    %1071 = vst [vmem:[#allocation3 + $0x18] sm:$0xff] %v1063
    %1072 = vst [vmem:[#allocation3 + $0x20] sm:$0xff] %v1064
    %1073 = vst [vmem:[#allocation3 + $0x28] sm:$0xff] %v1065
    %1074 = vst [vmem:[#allocation3 + $0x30] sm:$0xff] %v1066
    %1075 = vst [vmem:[#allocation3 + $0x38] sm:$0xff] %v1067
    // Predicated region
    $region30: #{tpu_custom_call.1} parent=1 // pred_check
      _
    $region31: #{tpu_custom_call.1} parent=1 // pred_check_branch
      %1077 = sbr.rel (0) target = $region33
    $region32: #{tpu_custom_call.1} parent=1 // pred_region
      %s1079 = ssub.s32 1024, 1024
      %1080 = vsyncadd [#allocation4], %s1079
      %s1081 = sshll.u32 [#allocation3], 4
      %s1082 = int_to_ptr.vmem [resolvable:$true] %s1081
      %1087 = dma.vmem_to_hbm [thread:$0]  %s1082, 1024, %s7, [#allocation4], 128, 128, 8
    $region33: #{tpu_custom_call.1} parent=1 // pred_fallthru
      _
    // Predicated region
    $region34: #{tpu_custom_call.1} parent=1 // pred_check
      _
    $region35: #{tpu_custom_call.1} parent=1 // pred_check_branch
      %1089 = sbr.rel (0) target = $region37
    $region36: #{tpu_custom_call.1} parent=1 // pred_region
      %1090 = dma.done [#allocation4], 1024
    $region37: #{tpu_custom_call.1} parent=1 // pred_fallthru
      _
    %1091 = vsyncpa [#allocation4], 1

</llo_original>
